<compile_context>
chip_gen: v5e
topology: v5e:2x2
jax: 0.10.0
libtpu: 0.0.40
codegen_flags: <defaults>
</compile_context>

<pallas_src>
import functools

import jax
import jax.numpy as jnp
from jax.experimental import pallas as pl
from jax.experimental.pallas import tpu as pltpu


PAD = 2     # spatial zero-padding = max dilation of the two branches
SLACK = 2   # extra zeros at both ends of the flattened buffer so every
            # im2col tap slice stays strictly in bounds


def _dsk_kernel(x_ref, mask_ref, w1_ref, b1_ref, w2_ref, b2_ref,
                fcw_ref, fcb_ref, fcsw_ref, fcsb_ref,
                out_ref, fea1_ref, fea2_ref, *, H, W):
    """Fused DSK forward for one batch element.

    x_ref    : (1, C, L)   bf16, L = (H+4)*(W+4) + 2*SLACK, zero-padded and
                           flattened row-major over the padded (H, W) plane
    mask_ref : (1, H*Wp)   f32, 1.0 on valid (non-padding) output columns
    w1_ref   : (C, 9C)     bf16 fused branch-0 conv weights (dilation 1)
    b1_ref   : (C, 1)      f32
    w2_ref   : (C, 9C)     bf16 fused branch-1 conv weights (dilation 2)
    b2_ref   : (C, 1)      f32
    fcw_ref  : (d, C) f32,  fcb_ref  : (d, 1)  f32
    fcsw_ref : (2C, d) f32, fcsb_ref : (2C, 1) f32
    out_ref  : (1, C, H*W) f32  (lane-dense store; wrapper reshape is free)
    fea1_ref / fea2_ref : (C, H*Wp) f32 VMEM scratch for the branch outputs
    """
    C = out_ref.shape[1]
    Wp = W + 2 * PAD
    HWp = H * Wp

    def conv_branch(w_ref, b_ref, fea_ref, dil):
        # im2col with lane axis = flattened spatial axis: every tap of the 3x3
        # (dilated) kernel is one contiguous lane-slice of the flattened padded
        # image, so the whole branch is a single wide-K MXU matmul.
        taps = []
        for kh in range(3):
            for kw in range(3):
                start = SLACK + (PAD + (kh - 1) * dil) * Wp + (kw - 1) * dil
                taps.append(x_ref[0, :, start:start + HWp])      # (C, HWp) bf16
        patches = jnp.concatenate(taps, axis=0)                  # (9C, HWp) bf16
        fea = jnp.dot(w_ref[...], patches,
                      preferred_element_type=jnp.float32)         # (C, HWp) f32
        fea_ref[...] = fea + b_ref[...]                            # bias (f32)

    conv_branch(w1_ref, b1_ref, fea1_ref, 1)
    conv_branch(w2_ref, b2_ref, fea2_ref, 2)

    fea1 = fea1_ref[...]
    fea2 = fea2_ref[...]
    fea_u = fea1 + fea2                                            # (C, HWp)

    # spatial mean over the H*W *valid* positions only (padding columns masked)
    fea_s = jnp.sum(fea_u * mask_ref[...], axis=1, keepdims=True) * (1.0 / (H * W))

    # fea_z = fc(fea_s); the two attention fcs are fused into one (2C, d) matmul
    fea_z = jnp.dot(fcw_ref[...], fea_s,
                    preferred_element_type=jnp.float32) + fcb_ref[...]       # (d, 1)
    vcat = jnp.dot(fcsw_ref[...], fea_z,
                   preferred_element_type=jnp.float32) + fcsb_ref[...]       # (2C, 1)

    v0 = vcat[0:C, :]
    v1 = vcat[C:2 * C, :]
    m = jnp.maximum(v0, v1)
    e0 = jnp.exp(v0 - m)
    e1 = jnp.exp(v1 - m)
    inv = 1.0 / (e0 + e1)
    a0 = e0 * inv
    a1 = e1 * inv

    fea_v = a0 * fea1 + a1 * fea2                                  # (C, HWp) f32

    # crop the padded columns: pack W-wide rows into the lane-dense (C, H*W) block
    for h in range(H):
        out_ref[0, :, h * W:(h + 1) * W] = fea_v[:, h * Wp + PAD:h * Wp + PAD + W]


@jax.jit
def dsk_forward(x_nchw, params):
    """x_nchw: (N, C, H, W) float32. Returns (N, C, H, W) float32."""
    w1, b1, w2, b2, fc_w, fc_b, fcs_w, fcs_b = params
    N, C, H, W = x_nchw.shape
    dz = fc_w.shape[1]
    Hp, Wp = H + 2 * PAD, W + 2 * PAD
    HWp = H * Wp
    L = Hp * Wp + 2 * SLACK

    # bf16 input for the MXU, zero-padded spatially, flattened; the cast and pads
    # fuse into one XLA pass and there are NO layout transposes in the wrapper.
    xp = jnp.pad(x_nchw.astype(jnp.bfloat16),
                 ((0, 0), (0, 0), (PAD, PAD), (PAD, PAD)))
    x_flat = jnp.pad(xp.reshape(N, C, Hp * Wp), ((0, 0), (0, 0), (SLACK, SLACK)))

    # fused conv weights (C_out, 9*C_in), tap-major / channel-minor (matches the
    # in-kernel im2col row order), bf16 for the MXU. Tiny; precompute in practice.
    w1r = jnp.transpose(w1, (3, 0, 1, 2)).reshape(C, 9 * C).astype(jnp.bfloat16)
    w2r = jnp.transpose(w2, (3, 0, 1, 2)).reshape(C, 9 * C).astype(jnp.bfloat16)
    b1c = b1.reshape(C, 1)
    b2c = b2.reshape(C, 1)
    fcw_k = fc_w.T                                   # (dz, C)
    fcb_k = fc_b.reshape(dz, 1)
    fcsw_k = jnp.transpose(fcs_w, (0, 2, 1)).reshape(2 * C, dz)
    fcsb_k = fcs_b.reshape(2 * C, 1)

    # 1.0 on real output columns, 0.0 on the horizontal padding columns
    row_valid = (jnp.arange(Wp) >= PAD) & (jnp.arange(Wp) < PAD + W)
    mask = jnp.tile(row_valid.astype(jnp.float32), H).reshape(1, HWp)

    kernel = functools.partial(_dsk_kernel, H=H, W=W)

    out_flat = pl.pallas_call(
        kernel,
        out_shape=jax.ShapeDtypeStruct((N, C, H * W), jnp.float32),
        grid_spec=pltpu.PrefetchScalarGridSpec(
            num_scalar_prefetch=0,
            grid=(N,),
            in_specs=[
                pl.BlockSpec((1, C, L), lambda n: (n, 0, 0)),
                pl.BlockSpec((1, HWp), lambda n: (0, 0)),
                pl.BlockSpec((C, 9 * C), lambda n: (0, 0)),
                pl.BlockSpec((C, 1), lambda n: (0, 0)),
                pl.BlockSpec((C, 9 * C), lambda n: (0, 0)),
                pl.BlockSpec((C, 1), lambda n: (0, 0)),
                pl.BlockSpec((dz, C), lambda n: (0, 0)),
                pl.BlockSpec((dz, 1), lambda n: (0, 0)),
                pl.BlockSpec((2 * C, dz), lambda n: (0, 0)),
                pl.BlockSpec((2 * C, 1), lambda n: (0, 0)),
            ],
            out_specs=pl.BlockSpec((1, C, H * W), lambda n: (n, 0, 0)),
            scratch_shapes=[
                pltpu.VMEM((C, HWp), jnp.float32),   # fea1
                pltpu.VMEM((C, HWp), jnp.float32),   # fea2
            ],
        ),
        compiler_params=pltpu.CompilerParams(
            dimension_semantics=("parallel",),       # batch axis -> both TCs on v7x
            vmem_limit_bytes=64 * 1024 * 1024,       # explicit, above default scoped
        ),
    )(x_flat, mask, w1r, b1c, w2r, b2c, fcw_k, fcb_k, fcsw_k, fcsb_k)

    return out_flat.reshape(N, C, H, W)              # free reshape, no transpose


def make_params(key, features, r, L=32):
    d = max(int(features / r), L)
    ks = jax.random.split(key, 8)
    scale = 0.1
    w1 = scale * jax.random.normal(ks[0], (3, 3, features, features), jnp.float32)
    b1 = scale * jax.random.normal(ks[1], (1, features), jnp.float32)
    w2 = scale * jax.random.normal(ks[2], (3, 3, features, features), jnp.float32)
    b2 = scale * jax.random.normal(ks[3], (1, features), jnp.float32)
    fc_w = scale * jax.random.normal(ks[4], (features, d), jnp.float32)
    fc_b = scale * jax.random.normal(ks[5], (1, d), jnp.float32)
    fcs_w = scale * jax.random.normal(ks[6], (2, d, features), jnp.float32)
    fcs_b = scale * jax.random.normal(ks[7], (2, features), jnp.float32)
    return (w1, b1, w2, b2, fc_w, fc_b, fcs_w, fcs_b)


def dsk_reference(x_nchw, params):
    """Pure-JAX f32 reference (same math, lax conv) for a sanity check."""
    w1, b1, w2, b2, fc_w, fc_b, fcs_w, fcs_b = params
    N, C, H, W = x_nchw.shape
    x = jnp.transpose(x_nchw, (0, 2, 3, 1))          # NHWC

    def conv(xin, w, dil):
        return jax.lax.conv_general_dilated(
            xin, w, window_strides=(1, 1),
            padding=((dil, dil), (dil, dil)),
            rhs_dilation=(dil, dil),
            dimension_numbers=("NHWC", "HWIO", "NHWC"))

    fea1 = conv(x, w1, 1) + b1.reshape(1, 1, 1, C)
    fea2 = conv(x, w2, 2) + b2.reshape(1, 1, 1, C)
    fea_u = fea1 + fea2
    fea_s = jnp.mean(fea_u, axis=(1, 2))             # (N, C)
    fea_z = fea_s @ fc_w + fc_b                      # (N, d)
    v0 = fea_z @ fcs_w[0] + fcs_b[0]                 # (N, C)
    v1 = fea_z @ fcs_w[1] + fcs_b[1]
    vs = jnp.stack([v0, v1], axis=1)                 # (N, 2, C)
    att = jax.nn.softmax(vs, axis=1)
    fea_v = fea1 * att[:, 0][:, None, None, :] + fea2 * att[:, 1][:, None, None, :]
    return jnp.transpose(fea_v, (0, 3, 1, 2))        # NCHW


if __name__ == "__main__":
    key = jax.random.PRNGKey(0)
    k_x, k_p = jax.random.split(key)

    N, C, H, W = 2, 4, 16, 16
    r = 2
    x = jax.random.normal(k_x, (N, C, H, W), jnp.float32)
    params = make_params(k_p, features=C, r=r)

    out = dsk_forward(x, params)
    out = jax.block_until_ready(out)

    ref = dsk_reference(x, params)
    assert out.shape == (N, C, H, W)
    # tolerance loosened vs the f32 reference because the conv matmuls now feed
    # bf16 operands to the MXU (f32 accumulation)
    assert jnp.allclose(out, ref, atol=3e-2, rtol=3e-2), "mismatch vs reference"

    print("KERNEL_OK")
</pallas_src>

<mosaic_0001>
module attributes {stable_mosaic.version = 11 : i64} {
  func.func @_dsk_kernel(%arg0: i32, %arg1: memref<1x4x404xbf16, #tpu.memory_space<vmem>>, %arg2: memref<1x320xf32, #tpu.memory_space<vmem>>, %arg3: memref<4x36xbf16, #tpu.memory_space<vmem>>, %arg4: memref<4x1xf32, #tpu.memory_space<vmem>>, %arg5: memref<4x36xbf16, #tpu.memory_space<vmem>>, %arg6: memref<4x1xf32, #tpu.memory_space<vmem>>, %arg7: memref<32x4xf32, #tpu.memory_space<vmem>>, %arg8: memref<32x1xf32, #tpu.memory_space<vmem>>, %arg9: memref<8x32xf32, #tpu.memory_space<vmem>>, %arg10: memref<8x1xf32, #tpu.memory_space<vmem>>, %arg11: memref<1x4x256xf32, #tpu.memory_space<vmem>>, %arg12: memref<4x320xf32, #tpu.memory_space<vmem>>, %arg13: memref<4x320xf32, #tpu.memory_space<vmem>>) attributes {dimension_semantics = [#tpu.dimension_semantics<parallel>], iteration_bounds = array<i64: 2>, scalar_prefetch = 0 : i64, scratch_operands = 2 : i64, tpu.core_type = #tpu.core_type<tc>, window_params = [{transform_indices = @transform_0, window_bounds = array<i64: 1, 4, 404>}, {pipeline_mode = #tpu.pipeline_mode<synchronous>, transform_indices = @transform_1, window_bounds = array<i64: 1, 320>}, {pipeline_mode = #tpu.pipeline_mode<synchronous>, transform_indices = @transform_2, window_bounds = array<i64: 4, 36>}, {pipeline_mode = #tpu.pipeline_mode<synchronous>, transform_indices = @transform_3, window_bounds = array<i64: 4, 1>}, {pipeline_mode = #tpu.pipeline_mode<synchronous>, transform_indices = @transform_4, window_bounds = array<i64: 4, 36>}, {pipeline_mode = #tpu.pipeline_mode<synchronous>, transform_indices = @transform_5, window_bounds = array<i64: 4, 1>}, {pipeline_mode = #tpu.pipeline_mode<synchronous>, transform_indices = @transform_6, window_bounds = array<i64: 32, 4>}, {pipeline_mode = #tpu.pipeline_mode<synchronous>, transform_indices = @transform_7, window_bounds = array<i64: 32, 1>}, {pipeline_mode = #tpu.pipeline_mode<synchronous>, transform_indices = @transform_8, window_bounds = array<i64: 8, 32>}, {pipeline_mode = #tpu.pipeline_mode<synchronous>, transform_indices = @transform_9, window_bounds = array<i64: 8, 1>}, {transform_indices = @transform_10, window_bounds = array<i64: 1, 4, 256>}]} {
    %c0 = arith.constant 0 : index
    %c0_0 = arith.constant 0 : index
    %c21 = arith.constant 21 : index
    %0 = vector.load %arg1[%c0, %c0_0, %c21] : memref<1x4x404xbf16, #tpu.memory_space<vmem>>, vector<1x4x320xbf16>
    %1 = vector.shape_cast %0 : vector<1x4x320xbf16> to vector<4x320xbf16>
    %c0_1 = arith.constant 0 : index
    %c0_2 = arith.constant 0 : index
    %c22 = arith.constant 22 : index
    %2 = vector.load %arg1[%c0_1, %c0_2, %c22] : memref<1x4x404xbf16, #tpu.memory_space<vmem>>, vector<1x4x320xbf16>
    %3 = vector.shape_cast %2 : vector<1x4x320xbf16> to vector<4x320xbf16>
    %c0_3 = arith.constant 0 : index
    %c0_4 = arith.constant 0 : index
    %c23 = arith.constant 23 : index
    %4 = vector.load %arg1[%c0_3, %c0_4, %c23] : memref<1x4x404xbf16, #tpu.memory_space<vmem>>, vector<1x4x320xbf16>
    %5 = vector.shape_cast %4 : vector<1x4x320xbf16> to vector<4x320xbf16>
    %c0_5 = arith.constant 0 : index
    %c0_6 = arith.constant 0 : index
    %c41 = arith.constant 41 : index
    %6 = vector.load %arg1[%c0_5, %c0_6, %c41] : memref<1x4x404xbf16, #tpu.memory_space<vmem>>, vector<1x4x320xbf16>
    %7 = vector.shape_cast %6 : vector<1x4x320xbf16> to vector<4x320xbf16>
    %c0_7 = arith.constant 0 : index
    %c0_8 = arith.constant 0 : index
    %c42 = arith.constant 42 : index
    %8 = vector.load %arg1[%c0_7, %c0_8, %c42] : memref<1x4x404xbf16, #tpu.memory_space<vmem>>, vector<1x4x320xbf16>
    %9 = vector.shape_cast %8 : vector<1x4x320xbf16> to vector<4x320xbf16>
    %c0_9 = arith.constant 0 : index
    %c0_10 = arith.constant 0 : index
    %c43 = arith.constant 43 : index
    %10 = vector.load %arg1[%c0_9, %c0_10, %c43] : memref<1x4x404xbf16, #tpu.memory_space<vmem>>, vector<1x4x320xbf16>
    %11 = vector.shape_cast %10 : vector<1x4x320xbf16> to vector<4x320xbf16>
    %c0_11 = arith.constant 0 : index
    %c0_12 = arith.constant 0 : index
    %c61 = arith.constant 61 : index
    %12 = vector.load %arg1[%c0_11, %c0_12, %c61] : memref<1x4x404xbf16, #tpu.memory_space<vmem>>, vector<1x4x320xbf16>
    %13 = vector.shape_cast %12 : vector<1x4x320xbf16> to vector<4x320xbf16>
    %c0_13 = arith.constant 0 : index
    %c0_14 = arith.constant 0 : index
    %c62 = arith.constant 62 : index
    %14 = vector.load %arg1[%c0_13, %c0_14, %c62] : memref<1x4x404xbf16, #tpu.memory_space<vmem>>, vector<1x4x320xbf16>
    %15 = vector.shape_cast %14 : vector<1x4x320xbf16> to vector<4x320xbf16>
    %c0_15 = arith.constant 0 : index
    %c0_16 = arith.constant 0 : index
    %c63 = arith.constant 63 : index
    %16 = vector.load %arg1[%c0_15, %c0_16, %c63] : memref<1x4x404xbf16, #tpu.memory_space<vmem>>, vector<1x4x320xbf16>
    %17 = vector.shape_cast %16 : vector<1x4x320xbf16> to vector<4x320xbf16>
    %18 = tpu.concatenate %1, %3, %5, %7, %9, %11, %13, %15, %17 in 0 : vector<4x320xbf16>, vector<4x320xbf16>, vector<4x320xbf16>, vector<4x320xbf16>, vector<4x320xbf16>, vector<4x320xbf16>, vector<4x320xbf16>, vector<4x320xbf16>, vector<4x320xbf16> -> vector<36x320xbf16>
    %c0_17 = arith.constant 0 : index
    %c0_18 = arith.constant 0 : index
    %19 = vector.load %arg3[%c0_17, %c0_18] : memref<4x36xbf16, #tpu.memory_space<vmem>>, vector<4x36xbf16>
    %cst = arith.constant dense<0.000000e+00> : vector<4x320xf32>
    %20 = tpu.matmul %19, %18, %cst {dimension_numbers = #tpu.dot_dimension_numbers<[1], [0], [0], [1], [0, 0, 1, 1], [], []>} : vector<4x36xbf16>, vector<36x320xbf16>, vector<4x320xf32> -> vector<4x320xf32>
    %c0_19 = arith.constant 0 : index
    %c0_20 = arith.constant 0 : index
    %21 = vector.load %arg4[%c0_19, %c0_20] : memref<4x1xf32, #tpu.memory_space<vmem>>, vector<4x1xf32>
    %22 = vector.broadcast %21 : vector<4x1xf32> to vector<4x320xf32>
    %23 = arith.addf %20, %22 : vector<4x320xf32>
    %c0_21 = arith.constant 0 : index
    %c0_22 = arith.constant 0 : index
    %24 = vector.load %arg12[%c0_21, %c0_22] : memref<4x320xf32, #tpu.memory_space<vmem>>, vector<4x320xf32>
    tpu.vector_store %arg12[%c0_21, %c0_22], %23 {strides = array<i32>} : memref<4x320xf32, #tpu.memory_space<vmem>>, vector<4x320xf32>,
    %c0_23 = arith.constant 0 : index
    %c0_24 = arith.constant 0 : index
    %c0_25 = arith.constant 0 : index
    %25 = vector.load %arg1[%c0_23, %c0_24, %c0_25] : memref<1x4x404xbf16, #tpu.memory_space<vmem>>, vector<1x4x320xbf16>
    %26 = vector.shape_cast %25 : vector<1x4x320xbf16> to vector<4x320xbf16>
    %c0_26 = arith.constant 0 : index
    %c0_27 = arith.constant 0 : index
    %c2 = arith.constant 2 : index
    %27 = vector.load %arg1[%c0_26, %c0_27, %c2] : memref<1x4x404xbf16, #tpu.memory_space<vmem>>, vector<1x4x320xbf16>
    %28 = vector.shape_cast %27 : vector<1x4x320xbf16> to vector<4x320xbf16>
    %c0_28 = arith.constant 0 : index
    %c0_29 = arith.constant 0 : index
    %c4 = arith.constant 4 : index
    %29 = vector.load %arg1[%c0_28, %c0_29, %c4] : memref<1x4x404xbf16, #tpu.memory_space<vmem>>, vector<1x4x320xbf16>
    %30 = vector.shape_cast %29 : vector<1x4x320xbf16> to vector<4x320xbf16>
    %c0_30 = arith.constant 0 : index
    %c0_31 = arith.constant 0 : index
    %c40 = arith.constant 40 : index
    %31 = vector.load %arg1[%c0_30, %c0_31, %c40] : memref<1x4x404xbf16, #tpu.memory_space<vmem>>, vector<1x4x320xbf16>
    %32 = vector.shape_cast %31 : vector<1x4x320xbf16> to vector<4x320xbf16>
    %c0_32 = arith.constant 0 : index
    %c0_33 = arith.constant 0 : index
    %c42_34 = arith.constant 42 : index
    %33 = vector.load %arg1[%c0_32, %c0_33, %c42_34] : memref<1x4x404xbf16, #tpu.memory_space<vmem>>, vector<1x4x320xbf16>
    %34 = vector.shape_cast %33 : vector<1x4x320xbf16> to vector<4x320xbf16>
    %c0_35 = arith.constant 0 : index
    %c0_36 = arith.constant 0 : index
    %c44 = arith.constant 44 : index
    %35 = vector.load %arg1[%c0_35, %c0_36, %c44] : memref<1x4x404xbf16, #tpu.memory_space<vmem>>, vector<1x4x320xbf16>
    %36 = vector.shape_cast %35 : vector<1x4x320xbf16> to vector<4x320xbf16>
    %c0_37 = arith.constant 0 : index
    %c0_38 = arith.constant 0 : index
    %c80 = arith.constant 80 : index
    %37 = vector.load %arg1[%c0_37, %c0_38, %c80] : memref<1x4x404xbf16, #tpu.memory_space<vmem>>, vector<1x4x320xbf16>
    %38 = vector.shape_cast %37 : vector<1x4x320xbf16> to vector<4x320xbf16>
    %c0_39 = arith.constant 0 : index
    %c0_40 = arith.constant 0 : index
    %c82 = arith.constant 82 : index
    %39 = vector.load %arg1[%c0_39, %c0_40, %c82] : memref<1x4x404xbf16, #tpu.memory_space<vmem>>, vector<1x4x320xbf16>
    %40 = vector.shape_cast %39 : vector<1x4x320xbf16> to vector<4x320xbf16>
    %c0_41 = arith.constant 0 : index
    %c0_42 = arith.constant 0 : index
    %c84 = arith.constant 84 : index
    %41 = vector.load %arg1[%c0_41, %c0_42, %c84] : memref<1x4x404xbf16, #tpu.memory_space<vmem>>, vector<1x4x320xbf16>
    %42 = vector.shape_cast %41 : vector<1x4x320xbf16> to vector<4x320xbf16>
    %43 = tpu.concatenate %26, %28, %30, %32, %34, %36, %38, %40, %42 in 0 : vector<4x320xbf16>, vector<4x320xbf16>, vector<4x320xbf16>, vector<4x320xbf16>, vector<4x320xbf16>, vector<4x320xbf16>, vector<4x320xbf16>, vector<4x320xbf16>, vector<4x320xbf16> -> vector<36x320xbf16>
    %c0_43 = arith.constant 0 : index
    %c0_44 = arith.constant 0 : index
    %44 = vector.load %arg5[%c0_43, %c0_44] : memref<4x36xbf16, #tpu.memory_space<vmem>>, vector<4x36xbf16>
    %cst_45 = arith.constant dense<0.000000e+00> : vector<4x320xf32>
    %45 = tpu.matmul %44, %43, %cst_45 {dimension_numbers = #tpu.dot_dimension_numbers<[1], [0], [0], [1], [0, 0, 1, 1], [], []>} : vector<4x36xbf16>, vector<36x320xbf16>, vector<4x320xf32> -> vector<4x320xf32>
    %c0_46 = arith.constant 0 : index
    %c0_47 = arith.constant 0 : index
    %46 = vector.load %arg6[%c0_46, %c0_47] : memref<4x1xf32, #tpu.memory_space<vmem>>, vector<4x1xf32>
    %47 = vector.broadcast %46 : vector<4x1xf32> to vector<4x320xf32>
    %48 = arith.addf %45, %47 : vector<4x320xf32>
    %c0_48 = arith.constant 0 : index
    %c0_49 = arith.constant 0 : index
    %49 = vector.load %arg13[%c0_48, %c0_49] : memref<4x320xf32, #tpu.memory_space<vmem>>, vector<4x320xf32>
    tpu.vector_store %arg13[%c0_48, %c0_49], %48 {strides = array<i32>} : memref<4x320xf32, #tpu.memory_space<vmem>>, vector<4x320xf32>,
    %c0_50 = arith.constant 0 : index
    %c0_51 = arith.constant 0 : index
    %50 = vector.load %arg12[%c0_50, %c0_51] : memref<4x320xf32, #tpu.memory_space<vmem>>, vector<4x320xf32>
    %c0_52 = arith.constant 0 : index
    %c0_53 = arith.constant 0 : index
    %51 = vector.load %arg13[%c0_52, %c0_53] : memref<4x320xf32, #tpu.memory_space<vmem>>, vector<4x320xf32>
    %52 = arith.addf %50, %51 : vector<4x320xf32>
    %c0_54 = arith.constant 0 : index
    %c0_55 = arith.constant 0 : index
    %53 = vector.load %arg2[%c0_54, %c0_55] : memref<1x320xf32, #tpu.memory_space<vmem>>, vector<1x320xf32>
    %54 = vector.broadcast %53 : vector<1x320xf32> to vector<4x320xf32>
    %55 = arith.mulf %52, %54 : vector<4x320xf32>
    %cst_56 = arith.constant dense<0.000000e+00> : vector<4xf32>
    %56 = vector.multi_reduction <add>, %55, %cst_56 [1] : vector<4x320xf32> to vector<4xf32>
    %57 = vector.shape_cast %56 : vector<4xf32> to vector<4x1xf32>
    %cst_57 = arith.constant 3.906250e-03 : f32
    %58 = vector.broadcast %cst_57 : f32 to vector<4x1xf32>
    %59 = arith.mulf %57, %58 : vector<4x1xf32>
    %c0_58 = arith.constant 0 : index
    %c0_59 = arith.constant 0 : index
    %60 = vector.load %arg7[%c0_58, %c0_59] : memref<32x4xf32, #tpu.memory_space<vmem>>, vector<32x4xf32>
    %cst_60 = arith.constant dense<0.000000e+00> : vector<32x1xf32>
    %61 = tpu.matmul %60, %59, %cst_60 {dimension_numbers = #tpu.dot_dimension_numbers<[1], [0], [0], [1], [0, 0, 1, 1], [], []>} : vector<32x4xf32>, vector<4x1xf32>, vector<32x1xf32> -> vector<32x1xf32>
    %c0_61 = arith.constant 0 : index
    %c0_62 = arith.constant 0 : index
    %62 = vector.load %arg8[%c0_61, %c0_62] : memref<32x1xf32, #tpu.memory_space<vmem>>, vector<32x1xf32>
    %63 = arith.addf %61, %62 : vector<32x1xf32>
    %c0_63 = arith.constant 0 : index
    %c0_64 = arith.constant 0 : index
    %64 = vector.load %arg9[%c0_63, %c0_64] : memref<8x32xf32, #tpu.memory_space<vmem>>, vector<8x32xf32>
    %cst_65 = arith.constant dense<0.000000e+00> : vector<8x1xf32>
    %65 = tpu.matmul %64, %63, %cst_65 {dimension_numbers = #tpu.dot_dimension_numbers<[1], [0], [0], [1], [0, 0, 1, 1], [], []>} : vector<8x32xf32>, vector<32x1xf32>, vector<8x1xf32> -> vector<8x1xf32>
    %c0_66 = arith.constant 0 : index
    %c0_67 = arith.constant 0 : index
    %66 = vector.load %arg10[%c0_66, %c0_67] : memref<8x1xf32, #tpu.memory_space<vmem>>, vector<8x1xf32>
    %67 = arith.addf %65, %66 : vector<8x1xf32>
    %68 = vector.extract_strided_slice %67 {offsets = [0, 0], sizes = [4, 1], strides = [1, 1]} : vector<8x1xf32> to vector<4x1xf32>
    %69 = vector.extract_strided_slice %67 {offsets = [4, 0], sizes = [4, 1], strides = [1, 1]} : vector<8x1xf32> to vector<4x1xf32>
    %70 = arith.maximumf %68, %69 : vector<4x1xf32>
    %71 = arith.subf %68, %70 : vector<4x1xf32>
    %72 = math.exp %71 : vector<4x1xf32>
    %73 = arith.subf %69, %70 : vector<4x1xf32>
    %74 = math.exp %73 : vector<4x1xf32>
    %75 = arith.addf %72, %74 : vector<4x1xf32>
    %cst_68 = arith.constant 1.000000e+00 : f32
    %76 = vector.broadcast %cst_68 : f32 to vector<4x1xf32>
    %77 = arith.divf %76, %75 : vector<4x1xf32>
    %78 = arith.mulf %72, %77 : vector<4x1xf32>
    %79 = arith.mulf %74, %77 : vector<4x1xf32>
    %80 = vector.broadcast %78 : vector<4x1xf32> to vector<4x320xf32>
    %81 = arith.mulf %80, %50 : vector<4x320xf32>
    %82 = vector.broadcast %79 : vector<4x1xf32> to vector<4x320xf32>
    %83 = arith.mulf %82, %51 : vector<4x320xf32>
    %84 = arith.addf %81, %83 : vector<4x320xf32>
    %85 = vector.extract_strided_slice %84 {offsets = [0, 2], sizes = [4, 16], strides = [1, 1]} : vector<4x320xf32> to vector<4x16xf32>
    %c0_69 = arith.constant 0 : index
    %c0_70 = arith.constant 0 : index
    %c0_71 = arith.constant 0 : index
    %86 = vector.load %arg11[%c0_69, %c0_70, %c0_71] : memref<1x4x256xf32, #tpu.memory_space<vmem>>, vector<1x4x16xf32>
    %87 = vector.shape_cast %86 : vector<1x4x16xf32> to vector<4x16xf32>
    %88 = vector.shape_cast %85 : vector<4x16xf32> to vector<1x4x16xf32>
    tpu.vector_store %arg11[%c0_69, %c0_70, %c0_71], %88 {strides = array<i32>} : memref<1x4x256xf32, #tpu.memory_space<vmem>>, vector<1x4x16xf32>,
    %89 = vector.extract_strided_slice %84 {offsets = [0, 22], sizes = [4, 16], strides = [1, 1]} : vector<4x320xf32> to vector<4x16xf32>
    %c0_72 = arith.constant 0 : index
    %c0_73 = arith.constant 0 : index
    %c16 = arith.constant 16 : index
    %90 = vector.load %arg11[%c0_72, %c0_73, %c16] : memref<1x4x256xf32, #tpu.memory_space<vmem>>, vector<1x4x16xf32>
    %91 = vector.shape_cast %90 : vector<1x4x16xf32> to vector<4x16xf32>
    %92 = vector.shape_cast %89 : vector<4x16xf32> to vector<1x4x16xf32>
    tpu.vector_store %arg11[%c0_72, %c0_73, %c16], %92 {strides = array<i32>} : memref<1x4x256xf32, #tpu.memory_space<vmem>>, vector<1x4x16xf32>,
    %93 = vector.extract_strided_slice %84 {offsets = [0, 42], sizes = [4, 16], strides = [1, 1]} : vector<4x320xf32> to vector<4x16xf32>
    %c0_74 = arith.constant 0 : index
    %c0_75 = arith.constant 0 : index
    %c32 = arith.constant 32 : index
    %94 = vector.load %arg11[%c0_74, %c0_75, %c32] : memref<1x4x256xf32, #tpu.memory_space<vmem>>, vector<1x4x16xf32>
    %95 = vector.shape_cast %94 : vector<1x4x16xf32> to vector<4x16xf32>
    %96 = vector.shape_cast %93 : vector<4x16xf32> to vector<1x4x16xf32>
    tpu.vector_store %arg11[%c0_74, %c0_75, %c32], %96 {strides = array<i32>} : memref<1x4x256xf32, #tpu.memory_space<vmem>>, vector<1x4x16xf32>,
    %97 = vector.extract_strided_slice %84 {offsets = [0, 62], sizes = [4, 16], strides = [1, 1]} : vector<4x320xf32> to vector<4x16xf32>
    %c0_76 = arith.constant 0 : index
    %c0_77 = arith.constant 0 : index
    %c48 = arith.constant 48 : index
    %98 = vector.load %arg11[%c0_76, %c0_77, %c48] : memref<1x4x256xf32, #tpu.memory_space<vmem>>, vector<1x4x16xf32>
    %99 = vector.shape_cast %98 : vector<1x4x16xf32> to vector<4x16xf32>
    %100 = vector.shape_cast %97 : vector<4x16xf32> to vector<1x4x16xf32>
    tpu.vector_store %arg11[%c0_76, %c0_77, %c48], %100 {strides = array<i32>} : memref<1x4x256xf32, #tpu.memory_space<vmem>>, vector<1x4x16xf32>,
    %101 = vector.extract_strided_slice %84 {offsets = [0, 82], sizes = [4, 16], strides = [1, 1]} : vector<4x320xf32> to vector<4x16xf32>
    %c0_78 = arith.constant 0 : index
    %c0_79 = arith.constant 0 : index
    %c64 = arith.constant 64 : index
    %102 = vector.load %arg11[%c0_78, %c0_79, %c64] : memref<1x4x256xf32, #tpu.memory_space<vmem>>, vector<1x4x16xf32>
    %103 = vector.shape_cast %102 : vector<1x4x16xf32> to vector<4x16xf32>
    %104 = vector.shape_cast %101 : vector<4x16xf32> to vector<1x4x16xf32>
    tpu.vector_store %arg11[%c0_78, %c0_79, %c64], %104 {strides = array<i32>} : memref<1x4x256xf32, #tpu.memory_space<vmem>>, vector<1x4x16xf32>,
    %105 = vector.extract_strided_slice %84 {offsets = [0, 102], sizes = [4, 16], strides = [1, 1]} : vector<4x320xf32> to vector<4x16xf32>
    %c0_80 = arith.constant 0 : index
    %c0_81 = arith.constant 0 : index
    %c80_82 = arith.constant 80 : index
    %106 = vector.load %arg11[%c0_80, %c0_81, %c80_82] : memref<1x4x256xf32, #tpu.memory_space<vmem>>, vector<1x4x16xf32>
    %107 = vector.shape_cast %106 : vector<1x4x16xf32> to vector<4x16xf32>
    %108 = vector.shape_cast %105 : vector<4x16xf32> to vector<1x4x16xf32>
    tpu.vector_store %arg11[%c0_80, %c0_81, %c80_82], %108 {strides = array<i32>} : memref<1x4x256xf32, #tpu.memory_space<vmem>>, vector<1x4x16xf32>,
    %109 = vector.extract_strided_slice %84 {offsets = [0, 122], sizes = [4, 16], strides = [1, 1]} : vector<4x320xf32> to vector<4x16xf32>
    %c0_83 = arith.constant 0 : index
    %c0_84 = arith.constant 0 : index
    %c96 = arith.constant 96 : index
    %110 = vector.load %arg11[%c0_83, %c0_84, %c96] : memref<1x4x256xf32, #tpu.memory_space<vmem>>, vector<1x4x16xf32>
    %111 = vector.shape_cast %110 : vector<1x4x16xf32> to vector<4x16xf32>
    %112 = vector.shape_cast %109 : vector<4x16xf32> to vector<1x4x16xf32>
    tpu.vector_store %arg11[%c0_83, %c0_84, %c96], %112 {strides = array<i32>} : memref<1x4x256xf32, #tpu.memory_space<vmem>>, vector<1x4x16xf32>,
    %113 = vector.extract_strided_slice %84 {offsets = [0, 142], sizes = [4, 16], strides = [1, 1]} : vector<4x320xf32> to vector<4x16xf32>
    %c0_85 = arith.constant 0 : index
    %c0_86 = arith.constant 0 : index
    %c112 = arith.constant 112 : index
    %114 = vector.load %arg11[%c0_85, %c0_86, %c112] : memref<1x4x256xf32, #tpu.memory_space<vmem>>, vector<1x4x16xf32>
    %115 = vector.shape_cast %114 : vector<1x4x16xf32> to vector<4x16xf32>
    %116 = vector.shape_cast %113 : vector<4x16xf32> to vector<1x4x16xf32>
    tpu.vector_store %arg11[%c0_85, %c0_86, %c112], %116 {strides = array<i32>} : memref<1x4x256xf32, #tpu.memory_space<vmem>>, vector<1x4x16xf32>,
    %117 = vector.extract_strided_slice %84 {offsets = [0, 162], sizes = [4, 16], strides = [1, 1]} : vector<4x320xf32> to vector<4x16xf32>
    %c0_87 = arith.constant 0 : index
    %c0_88 = arith.constant 0 : index
    %c128 = arith.constant 128 : index
    %118 = vector.load %arg11[%c0_87, %c0_88, %c128] : memref<1x4x256xf32, #tpu.memory_space<vmem>>, vector<1x4x16xf32>
    %119 = vector.shape_cast %118 : vector<1x4x16xf32> to vector<4x16xf32>
    %120 = vector.shape_cast %117 : vector<4x16xf32> to vector<1x4x16xf32>
    tpu.vector_store %arg11[%c0_87, %c0_88, %c128], %120 {strides = array<i32>} : memref<1x4x256xf32, #tpu.memory_space<vmem>>, vector<1x4x16xf32>,
    %121 = vector.extract_strided_slice %84 {offsets = [0, 182], sizes = [4, 16], strides = [1, 1]} : vector<4x320xf32> to vector<4x16xf32>
    %c0_89 = arith.constant 0 : index
    %c0_90 = arith.constant 0 : index
    %c144 = arith.constant 144 : index
    %122 = vector.load %arg11[%c0_89, %c0_90, %c144] : memref<1x4x256xf32, #tpu.memory_space<vmem>>, vector<1x4x16xf32>
    %123 = vector.shape_cast %122 : vector<1x4x16xf32> to vector<4x16xf32>
    %124 = vector.shape_cast %121 : vector<4x16xf32> to vector<1x4x16xf32>
    tpu.vector_store %arg11[%c0_89, %c0_90, %c144], %124 {strides = array<i32>} : memref<1x4x256xf32, #tpu.memory_space<vmem>>, vector<1x4x16xf32>,
    %125 = vector.extract_strided_slice %84 {offsets = [0, 202], sizes = [4, 16], strides = [1, 1]} : vector<4x320xf32> to vector<4x16xf32>
    %c0_91 = arith.constant 0 : index
    %c0_92 = arith.constant 0 : index
    %c160 = arith.constant 160 : index
    %126 = vector.load %arg11[%c0_91, %c0_92, %c160] : memref<1x4x256xf32, #tpu.memory_space<vmem>>, vector<1x4x16xf32>
    %127 = vector.shape_cast %126 : vector<1x4x16xf32> to vector<4x16xf32>
    %128 = vector.shape_cast %125 : vector<4x16xf32> to vector<1x4x16xf32>
    tpu.vector_store %arg11[%c0_91, %c0_92, %c160], %128 {strides = array<i32>} : memref<1x4x256xf32, #tpu.memory_space<vmem>>, vector<1x4x16xf32>,
    %129 = vector.extract_strided_slice %84 {offsets = [0, 222], sizes = [4, 16], strides = [1, 1]} : vector<4x320xf32> to vector<4x16xf32>
    %c0_93 = arith.constant 0 : index
    %c0_94 = arith.constant 0 : index
    %c176 = arith.constant 176 : index
    %130 = vector.load %arg11[%c0_93, %c0_94, %c176] : memref<1x4x256xf32, #tpu.memory_space<vmem>>, vector<1x4x16xf32>
    %131 = vector.shape_cast %130 : vector<1x4x16xf32> to vector<4x16xf32>
    %132 = vector.shape_cast %129 : vector<4x16xf32> to vector<1x4x16xf32>
    tpu.vector_store %arg11[%c0_93, %c0_94, %c176], %132 {strides = array<i32>} : memref<1x4x256xf32, #tpu.memory_space<vmem>>, vector<1x4x16xf32>,
    %133 = vector.extract_strided_slice %84 {offsets = [0, 242], sizes = [4, 16], strides = [1, 1]} : vector<4x320xf32> to vector<4x16xf32>
    %c0_95 = arith.constant 0 : index
    %c0_96 = arith.constant 0 : index
    %c192 = arith.constant 192 : index
    %134 = vector.load %arg11[%c0_95, %c0_96, %c192] : memref<1x4x256xf32, #tpu.memory_space<vmem>>, vector<1x4x16xf32>
    %135 = vector.shape_cast %134 : vector<1x4x16xf32> to vector<4x16xf32>
    %136 = vector.shape_cast %133 : vector<4x16xf32> to vector<1x4x16xf32>
    tpu.vector_store %arg11[%c0_95, %c0_96, %c192], %136 {strides = array<i32>} : memref<1x4x256xf32, #tpu.memory_space<vmem>>, vector<1x4x16xf32>,
    %137 = vector.extract_strided_slice %84 {offsets = [0, 262], sizes = [4, 16], strides = [1, 1]} : vector<4x320xf32> to vector<4x16xf32>
    %c0_97 = arith.constant 0 : index
    %c0_98 = arith.constant 0 : index
    %c208 = arith.constant 208 : index
    %138 = vector.load %arg11[%c0_97, %c0_98, %c208] : memref<1x4x256xf32, #tpu.memory_space<vmem>>, vector<1x4x16xf32>
    %139 = vector.shape_cast %138 : vector<1x4x16xf32> to vector<4x16xf32>
    %140 = vector.shape_cast %137 : vector<4x16xf32> to vector<1x4x16xf32>
    tpu.vector_store %arg11[%c0_97, %c0_98, %c208], %140 {strides = array<i32>} : memref<1x4x256xf32, #tpu.memory_space<vmem>>, vector<1x4x16xf32>,
    %141 = vector.extract_strided_slice %84 {offsets = [0, 282], sizes = [4, 16], strides = [1, 1]} : vector<4x320xf32> to vector<4x16xf32>
    %c0_99 = arith.constant 0 : index
    %c0_100 = arith.constant 0 : index
    %c224 = arith.constant 224 : index
    %142 = vector.load %arg11[%c0_99, %c0_100, %c224] : memref<1x4x256xf32, #tpu.memory_space<vmem>>, vector<1x4x16xf32>
    %143 = vector.shape_cast %142 : vector<1x4x16xf32> to vector<4x16xf32>
    %144 = vector.shape_cast %141 : vector<4x16xf32> to vector<1x4x16xf32>
    tpu.vector_store %arg11[%c0_99, %c0_100, %c224], %144 {strides = array<i32>} : memref<1x4x256xf32, #tpu.memory_space<vmem>>, vector<1x4x16xf32>,
    %145 = vector.extract_strided_slice %84 {offsets = [0, 302], sizes = [4, 16], strides = [1, 1]} : vector<4x320xf32> to vector<4x16xf32>
    %c0_101 = arith.constant 0 : index
    %c0_102 = arith.constant 0 : index
    %c240 = arith.constant 240 : index
    %146 = vector.load %arg11[%c0_101, %c0_102, %c240] : memref<1x4x256xf32, #tpu.memory_space<vmem>>, vector<1x4x16xf32>
    %147 = vector.shape_cast %146 : vector<1x4x16xf32> to vector<4x16xf32>
    %148 = vector.shape_cast %145 : vector<4x16xf32> to vector<1x4x16xf32>
    tpu.vector_store %arg11[%c0_101, %c0_102, %c240], %148 {strides = array<i32>} : memref<1x4x256xf32, #tpu.memory_space<vmem>>, vector<1x4x16xf32>,
    return
  }
  func.func @transform_0(%arg0: i32) -> (i32, i32, i32) {
    %c0_i32 = arith.constant 0 : i32
    %c0_i32_0 = arith.constant 0 : i32
    %c0_i32_1 = arith.constant 0 : i32
    return %arg0, %c0_i32, %c0_i32_0 : i32, i32, i32
  }
  func.func @transform_1(%arg0: i32) -> (i32, i32) {
    %c0_i32 = arith.constant 0 : i32
    %c0_i32_0 = arith.constant 0 : i32
    %c0_i32_1 = arith.constant 0 : i32
    return %c0_i32, %c0_i32_0 : i32, i32
  }
  func.func @transform_2(%arg0: i32) -> (i32, i32) {
    %c0_i32 = arith.constant 0 : i32
    %c0_i32_0 = arith.constant 0 : i32
    %c0_i32_1 = arith.constant 0 : i32
    return %c0_i32, %c0_i32_0 : i32, i32
  }
  func.func @transform_3(%arg0: i32) -> (i32, i32) {
    %c0_i32 = arith.constant 0 : i32
    %c0_i32_0 = arith.constant 0 : i32
    %c0_i32_1 = arith.constant 0 : i32
    return %c0_i32, %c0_i32_0 : i32, i32
  }
  func.func @transform_4(%arg0: i32) -> (i32, i32) {
    %c0_i32 = arith.constant 0 : i32
    %c0_i32_0 = arith.constant 0 : i32
    %c0_i32_1 = arith.constant 0 : i32
    return %c0_i32, %c0_i32_0 : i32, i32
  }
  func.func @transform_5(%arg0: i32) -> (i32, i32) {
    %c0_i32 = arith.constant 0 : i32
    %c0_i32_0 = arith.constant 0 : i32
    %c0_i32_1 = arith.constant 0 : i32
    return %c0_i32, %c0_i32_0 : i32, i32
  }
  func.func @transform_6(%arg0: i32) -> (i32, i32) {
    %c0_i32 = arith.constant 0 : i32
    %c0_i32_0 = arith.constant 0 : i32
    %c0_i32_1 = arith.constant 0 : i32
    return %c0_i32, %c0_i32_0 : i32, i32
  }
  func.func @transform_7(%arg0: i32) -> (i32, i32) {
    %c0_i32 = arith.constant 0 : i32
    %c0_i32_0 = arith.constant 0 : i32
    %c0_i32_1 = arith.constant 0 : i32
    return %c0_i32, %c0_i32_0 : i32, i32
  }
  func.func @transform_8(%arg0: i32) -> (i32, i32) {
    %c0_i32 = arith.constant 0 : i32
    %c0_i32_0 = arith.constant 0 : i32
    %c0_i32_1 = arith.constant 0 : i32
    return %c0_i32, %c0_i32_0 : i32, i32
  }
  func.func @transform_9(%arg0: i32) -> (i32, i32) {
    %c0_i32 = arith.constant 0 : i32
    %c0_i32_0 = arith.constant 0 : i32
    %c0_i32_1 = arith.constant 0 : i32
    return %c0_i32, %c0_i32_0 : i32, i32
  }
  func.func @transform_10(%arg0: i32) -> (i32, i32, i32) {
    %c0_i32 = arith.constant 0 : i32
    %c0_i32_0 = arith.constant 0 : i32
    %c0_i32_1 = arith.constant 0 : i32
    return %arg0, %c0_i32, %c0_i32_0 : i32, i32, i32
  }
}

</mosaic_0001>

<llo_original>
// kernel: tile.8
$region0: #{tile.8}
  #allocation0 [shape = 's32[1]{0}', space=sflag, size = 0x4, scoped, tag = 'scoped memory for tile.8']
  %s0 = inlined_call_operand.vmem [shape: f32[20], index: 0, kind: input, shape index: {}]
  %s1 = inlined_call_operand.vmem [shape: f32[16,20], index: 1, kind: output, shape index: {}]
  // Predicated region
  $region2: #{tile.8} parent=0 // pred_check
    _
  $region3: #{tile.8} parent=0 // pred_check_branch
    %3 = sbr.rel (0) target = $region5
  $region4: #{tile.8} parent=0 // pred_region
    _
  $region5: #{tile.8} parent=0 // pred_fallthru
    _
  %v4 = vld [vmem:[%s0] ss:$0 sm:$0xff]
  %5 = vst [vmem:[%s1] sm:$0xff] %v4
  %s6 = scalar_lea.vmem %s1, 8
  %7 = vst [vmem:[%s6] sm:$0xff] %v4

// kernel: tile.9
$region0: #{tile.9}
  %s0 = inlined_call_operand.vmem [shape: f32[16,20], index: 0, kind: input, shape index: {}]
  %s1 = inlined_call_operand.vmem [shape: f32[1,320], index: 1, kind: output, shape index: {}]
  $region1: #{tile.9} parent=0
    #allocation0 [shape = 'u8[12288]{0}', space=vmem, size = 0x3000, scoped, tag = 'scoped mem for output reshape']
    %v2 = vld [vmem:[%s0] sm:$0x1]
    %vm3 = vcmask 162816
    %4 = vst.msk [vmem:[#allocation0] sm:$0x1] %vm3, %v2
    %s5 = scalar_lea.vmem %s0, 6
    %v6 = vld [vmem:[%s5] sm:$0x1]
    %s7 = scalar_lea.vmem %s0, 6
    %v8 = vld [vmem:[%s7] sm:$0x1]
    %vm9 = vcmask 64512
    %v10 = vsel %vm9, %v8, %v6
    %11 = vrot.lane.b32.xlu0 %v10, 120
    %v12 = vpop.permute.xlu0 %11
    %vm13 = vcmask 97280
    %s14 = scalar_lea.vmem [#allocation0], 8
    %15 = vst.msk [vmem:[%s14] sm:$0x1] %vm13, %v12
    %vm16 = vcmask 1048512
    %17 = vst.msk [vmem:[#allocation0] sm:$0x1] %vm16, %v12
    %s18 = scalar_lea.vmem %s0, 12
    %v19 = vld [vmem:[%s18] sm:$0x1]
    %s20 = scalar_lea.vmem %s0, 12
    %v21 = vld [vmem:[%s20] sm:$0x1]
    %vm22 = vcmask 130048
    %v23 = vsel %vm22, %v21, %v19
    %24 = vrot.lane.b32.xlu0 %v23, 112
    %v25 = vpop.permute.xlu0 %24
    %vm26 = vcmask 31744
    %s27 = scalar_lea.vmem [#allocation0], 16
    %28 = vst.msk [vmem:[%s27] sm:$0x1] %vm26, %v25
    %vm29 = vcmask 1048448
    %s30 = scalar_lea.vmem [#allocation0], 8
    %31 = vst.msk [vmem:[%s30] sm:$0x1] %vm29, %v25
    %s32 = scalar_lea.vmem %s0, 5
    %v33 = vld [vmem:[%s32] sm:$0x1]
    %34 = vrot.lane.b32.xlu0 %v33, 100
    %v35 = vpop.permute.xlu0 %34
    %vm36 = vcmask 982816
    %37 = vst.msk [vmem:[#allocation0] sm:$0x1] %vm36, %v35
    %s38 = scalar_lea.vmem %s0, 11
    %v39 = vld [vmem:[%s38] sm:$0x1]
    %40 = vrot.lane.b32.xlu0 %v39, 92
    %v41 = vpop.permute.xlu0 %40
    %vm42 = vcmask 917216
    %s43 = scalar_lea.vmem [#allocation0], 8
    %44 = vst.msk [vmem:[%s43] sm:$0x1] %vm42, %v41
    %s45 = scalar_lea.vmem %s0, 4
    %v46 = vld [vmem:[%s45] sm:$0x1]
    %47 = vrot.lane.b32.xlu0 %v46, 80
    %v48 = vpop.permute.xlu0 %47
    %vm49 = vcmask 818816
    %50 = vst.msk [vmem:[#allocation0] sm:$0x1] %vm49, %v48
    %s51 = scalar_lea.vmem %s0, 10
    %v52 = vld [vmem:[%s51] sm:$0x1]
    %53 = vrot.lane.b32.xlu0 %v52, 72
    %v54 = vpop.permute.xlu0 %53
    %vm55 = vcmask 753216
    %s56 = scalar_lea.vmem [#allocation0], 8
    %57 = vst.msk [vmem:[%s56] sm:$0x1] %vm55, %v54
    %s58 = scalar_lea.vmem %s0, 3
    %v59 = vld [vmem:[%s58] sm:$0x1]
    %60 = vrot.lane.b32.xlu0 %v59, 60
    %v61 = vpop.permute.xlu0 %60
    %vm62 = vcmask 654816
    %63 = vst.msk [vmem:[#allocation0] sm:$0x1] %vm62, %v61
    %s64 = scalar_lea.vmem %s0, 9
    %v65 = vld [vmem:[%s64] sm:$0x1]
    %66 = vrot.lane.b32.xlu0 %v65, 52
    %v67 = vpop.permute.xlu0 %66
    %vm68 = vcmask 589216
    %s69 = scalar_lea.vmem [#allocation0], 8
    %70 = vst.msk [vmem:[%s69] sm:$0x1] %vm68, %v67
    %s71 = scalar_lea.vmem %s0, 15
    %v72 = vld [vmem:[%s71] sm:$0x1]
    %73 = vrot.lane.b32.xlu0 %v72, 44
    %v74 = vpop.permute.xlu0 %73
    %vm75 = vcmask 523616
    %s76 = scalar_lea.vmem [#allocation0], 16
    %77 = vst.msk [vmem:[%s76] sm:$0x1] %vm75, %v74
    %s78 = scalar_lea.vmem %s0, 2
    %v79 = vld [vmem:[%s78] sm:$0x1]
    %80 = vrot.lane.b32.xlu0 %v79, 40
    %v81 = vpop.permute.xlu0 %80
    %vm82 = vcmask 490816
    %83 = vst.msk [vmem:[#allocation0] sm:$0x1] %vm82, %v81
    %s84 = scalar_lea.vmem %s0, 8
    %v85 = vld [vmem:[%s84] sm:$0x1]
    %86 = vrot.lane.b32.xlu0 %v85, 32
    %v87 = vpop.permute.xlu0 %86
    %vm88 = vcmask 425216
    %s89 = scalar_lea.vmem [#allocation0], 8
    %90 = vst.msk [vmem:[%s89] sm:$0x1] %vm88, %v87
    %s91 = scalar_lea.vmem %s0, 14
    %v92 = vld [vmem:[%s91] sm:$0x1]
    %93 = vrot.lane.b32.xlu0 %v92, 24
    %v94 = vpop.permute.xlu0 %93
    %vm95 = vcmask 359616
    %s96 = scalar_lea.vmem [#allocation0], 16
    %97 = vst.msk [vmem:[%s96] sm:$0x1] %vm95, %v94
    %s98 = scalar_lea.vmem %s0, 1
    %v99 = vld [vmem:[%s98] sm:$0x1]
    %100 = vrot.lane.b32.xlu0 %v99, 20
    %v101 = vpop.permute.xlu0 %100
    %vm102 = vcmask 326816
    %103 = vst.msk [vmem:[#allocation0] sm:$0x1] %vm102, %v101
    %s104 = scalar_lea.vmem %s0, 7
    %v105 = vld [vmem:[%s104] sm:$0x1]
    %106 = vrot.lane.b32.xlu0 %v105, 12
    %v107 = vpop.permute.xlu0 %106
    %vm108 = vcmask 261216
    %s109 = scalar_lea.vmem [#allocation0], 8
    %110 = vst.msk [vmem:[%s109] sm:$0x1] %vm108, %v107
    %s111 = scalar_lea.vmem %s0, 13
    %v112 = vld [vmem:[%s111] sm:$0x1]
    %113 = vrot.lane.b32.xlu0 %v112, 4
    %v114 = vpop.permute.xlu0 %113
    %vm115 = vcmask 195616
    %s116 = scalar_lea.vmem [#allocation0], 16
    %117 = vst.msk [vmem:[%s116] sm:$0x1] %vm115, %v114
    %s119 = ssub.s32 2, 1
    %v120 = vld [vmem:[#allocation0] sm:%s119]
    %s122 = ssub.s32 2, 1
    %123 = vst [vmem:[%s1] sm:%s122] %v120
    %s124 = scalar_lea.vmem [#allocation0], 8
    %v125 = vld [vmem:[%s124] sm:%s119]
    %s127 = ssub.s32 2, 1
    %s128 = scalar_lea.vmem %s1, 1
    %129 = vst [vmem:[%s128] sm:%s127] %v125
    %s130 = scalar_lea.vmem [#allocation0], 16
    %v131 = vld [vmem:[%s130] sm:%s119]
    %s133 = ssub.s32 2, 1
    %s134 = scalar_lea.vmem %s1, 2
    %135 = vst [vmem:[%s134] sm:%s133] %v131

// kernel: dsk_forward.1
$region0: #{dsk_forward.1}
  #allocation0 [shape = 'u32[]', space=smem, size = 0x4, offset = 0x4, fixed_abs, tag = 'smem constant byte address 0x4 - core index']
  #allocation1 [shape = 'u32[72,128]{1,0:T(1,128)}', space=vmem, size = 0x9000, scoped, tag = 'internal scratch']
  #allocation2 [shape = 'f32[4,320]{1,0:T(4,128)}', space=vmem, size = 0x1800, scoped, tag = 'scratch operand']
  #allocation3 [shape = 'f32[4,320]{1,0:T(4,128)}', space=vmem, size = 0x1800, scoped, tag = 'scratch operand']
  %s0 = inlined_call_operand.vmem [shape: bf16[2,4,404], index: 0, kind: input, shape index: {}]
  %s1 = inlined_call_operand.vmem [shape: f32[1,320], index: 1, kind: input, shape index: {}]
  %s2 = inlined_call_operand.vmem [shape: bf16[4,36], index: 2, kind: input, shape index: {}]
  %s3 = inlined_call_operand.vmem [shape: f32[4,1], index: 3, kind: input, shape index: {}]
  %s4 = inlined_call_operand.vmem [shape: bf16[4,36], index: 4, kind: input, shape index: {}]
  %s5 = inlined_call_operand.vmem [shape: f32[4,1], index: 5, kind: input, shape index: {}]
  %s6 = inlined_call_operand.vmem [shape: f32[32,4], index: 6, kind: input, shape index: {}]
  %s7 = inlined_call_operand.vmem [shape: f32[32,1], index: 7, kind: input, shape index: {}]
  %s8 = inlined_call_operand.vmem [shape: f32[8,32], index: 8, kind: input, shape index: {}]
  %s9 = inlined_call_operand.vmem [shape: f32[8,1], index: 9, kind: input, shape index: {}]
  %s10 = inlined_call_operand.vmem [shape: f32[2,4,256], index: 10, kind: output, shape index: {}]
  %s11 = sld [smem:[#allocation0]]
  $region73: #{dsk_forward.1} parent=0
    _
  %s13 = ssub.s32 1, %s11
  %s14 = scalar_select 0, %s13, %s11
  loop: start=0, step=1, limit=4
  $region2: #{dsk_forward.1} parent=0 // loop_pre_header
    _
  $region3: #{dsk_forward.1} parent=0 // loop_header
    %s16 = sphi 0, %s20
    %p17 = scmp.ge.s32.totalorder %s16, 4
    %s26 = sphi 0, %s28
    %s29 = sphi 0, %s26
    %s30 = sphi 0, %s29
    %s46 = sphi 0, %s30
    %s50 = sphi 0, %s50
    %s52 = sphi 0, %s50
    %s53 = sphi 0, %s52
    %s67 = sphi 0, %s53
    %s71 = sphi 0, %s71
    %s73 = sphi 0, %s71
    %s74 = sphi 0, %s73
    %s88 = sphi 0, %s74
    %s92 = sphi 0, %s92
    %s94 = sphi 0, %s92
    %s95 = sphi 0, %s94
    %s109 = sphi 0, %s95
    %s113 = sphi 0, %s113
    %s115 = sphi 0, %s113
    %s116 = sphi 0, %s115
    %s130 = sphi 0, %s116
    %s134 = sphi 0, %s134
    %s136 = sphi 0, %s134
    %s137 = sphi 0, %s136
    %s151 = sphi 0, %s137
    %s155 = sphi 0, %s155
    %s157 = sphi 0, %s155
    %s158 = sphi 0, %s157
    %s172 = sphi 0, %s158
    %s176 = sphi 0, %s176
    %s178 = sphi 0, %s176
    %s179 = sphi 0, %s178
    %s193 = sphi 0, %s179
    %s197 = sphi 0, %s197
    %s199 = sphi 0, %s197
    %s200 = sphi 0, %s199
    %s214 = sphi 0, %s200
    %s218 = sphi 0, %s218
    %s220 = sphi 0, %s218
    %s221 = sphi 0, %s220
    %s235 = sphi 0, %s221
    %s241 = sphi 0, %s243
    %s244 = sphi 0, %s241
    %s245 = sphi 0, %s244
    %s261 = sphi 0, %s245
  $region4: #{dsk_forward.1} parent=0 // loop_header_branch
    %19 = sbr.rel (%p17) target = $region8
  $region5: #{dsk_forward.1} parent=0 // loop_body
    %s21 = ssub.s32 %s16, 1
    %s22 = ssub.s32 %s16, 2
    %s23 = sadd.s32 %s16, 1
    %s24 = ssub.s32 %s16, %s23
    %p25 = scmp.eq.s32.totalorder %s24, 0
    %s27 = sadd.s32 %s26, 1
    %s28 = scalar_select %p25, %s26, %s27
    %p31 = pneg %p25
    %p32 = scmp.eq.s32.totalorder %s16, 1
    %p33 = por %p31, %p32
    %p34 = scmp.ne.s32.totalorder %s26, %s29
    %p35 = scmp.eq.s32.totalorder %s16, 0
    %p36 = por %p34, %p35
    %p37 = scmp.ne.s32.totalorder %s26, %s29
    %p38 = scmp.eq.s32.totalorder %s21, 1
    %p39 = por %p37, %p38
    %p40 = scmp.ne.s32.totalorder %s29, %s30
    %p41 = scmp.eq.s32.totalorder %s21, 0
    %p42 = por %p40, %p41
    %p43 = scmp.ne.s32.totalorder %s29, %s30
    %p44 = scmp.eq.s32.totalorder %s22, 1
    %p45 = por %p43, %p44
    %p47 = scmp.ne.s32.totalorder %s30, %s46
    %p48 = scmp.eq.s32.totalorder %s22, 0
    %p49 = por %p47, %p48
    %s51 = sadd.s32 %s50, 1
    %p54 = scmp.eq.s32.totalorder %s16, 1
    %p55 = scmp.ne.s32.totalorder %s50, %s52
    %p56 = scmp.eq.s32.totalorder %s16, 0
    %p57 = por %p55, %p56
    %p58 = scmp.ne.s32.totalorder %s50, %s52
    %p59 = scmp.eq.s32.totalorder %s21, 1
    %p60 = por %p58, %p59
    %p61 = scmp.ne.s32.totalorder %s52, %s53
    %p62 = scmp.eq.s32.totalorder %s21, 0
    %p63 = por %p61, %p62
    %p64 = scmp.ne.s32.totalorder %s52, %s53
    %p65 = scmp.eq.s32.totalorder %s22, 1
    %p66 = por %p64, %p65
    %p68 = scmp.ne.s32.totalorder %s53, %s67
    %p69 = scmp.eq.s32.totalorder %s22, 0
    %p70 = por %p68, %p69
    %s72 = sadd.s32 %s71, 1
    %p75 = scmp.eq.s32.totalorder %s16, 1
    %p76 = scmp.ne.s32.totalorder %s71, %s73
    %p77 = scmp.eq.s32.totalorder %s16, 0
    %p78 = por %p76, %p77
    %p79 = scmp.ne.s32.totalorder %s71, %s73
    %p80 = scmp.eq.s32.totalorder %s21, 1
    %p81 = por %p79, %p80
    %p82 = scmp.ne.s32.totalorder %s73, %s74
    %p83 = scmp.eq.s32.totalorder %s21, 0
    %p84 = por %p82, %p83
    %p85 = scmp.ne.s32.totalorder %s73, %s74
    %p86 = scmp.eq.s32.totalorder %s22, 1
    %p87 = por %p85, %p86
    %p89 = scmp.ne.s32.totalorder %s74, %s88
    %p90 = scmp.eq.s32.totalorder %s22, 0
    %p91 = por %p89, %p90
    %s93 = sadd.s32 %s92, 1
    %p96 = scmp.eq.s32.totalorder %s16, 1
    %p97 = scmp.ne.s32.totalorder %s92, %s94
    %p98 = scmp.eq.s32.totalorder %s16, 0
    %p99 = por %p97, %p98
    %p100 = scmp.ne.s32.totalorder %s92, %s94
    %p101 = scmp.eq.s32.totalorder %s21, 1
    %p102 = por %p100, %p101
    %p103 = scmp.ne.s32.totalorder %s94, %s95
    %p104 = scmp.eq.s32.totalorder %s21, 0
    %p105 = por %p103, %p104
    %p106 = scmp.ne.s32.totalorder %s94, %s95
    %p107 = scmp.eq.s32.totalorder %s22, 1
    %p108 = por %p106, %p107
    %p110 = scmp.ne.s32.totalorder %s95, %s109
    %p111 = scmp.eq.s32.totalorder %s22, 0
    %p112 = por %p110, %p111
    %s114 = sadd.s32 %s113, 1
    %p117 = scmp.eq.s32.totalorder %s16, 1
    %p118 = scmp.ne.s32.totalorder %s113, %s115
    %p119 = scmp.eq.s32.totalorder %s16, 0
    %p120 = por %p118, %p119
    %p121 = scmp.ne.s32.totalorder %s113, %s115
    %p122 = scmp.eq.s32.totalorder %s21, 1
    %p123 = por %p121, %p122
    %p124 = scmp.ne.s32.totalorder %s115, %s116
    %p125 = scmp.eq.s32.totalorder %s21, 0
    %p126 = por %p124, %p125
    %p127 = scmp.ne.s32.totalorder %s115, %s116
    %p128 = scmp.eq.s32.totalorder %s22, 1
    %p129 = por %p127, %p128
    %p131 = scmp.ne.s32.totalorder %s116, %s130
    %p132 = scmp.eq.s32.totalorder %s22, 0
    %p133 = por %p131, %p132
    %s135 = sadd.s32 %s134, 1
    %p138 = scmp.eq.s32.totalorder %s16, 1
    %p139 = scmp.ne.s32.totalorder %s134, %s136
    %p140 = scmp.eq.s32.totalorder %s16, 0
    %p141 = por %p139, %p140
    %p142 = scmp.ne.s32.totalorder %s134, %s136
    %p143 = scmp.eq.s32.totalorder %s21, 1
    %p144 = por %p142, %p143
    %p145 = scmp.ne.s32.totalorder %s136, %s137
    %p146 = scmp.eq.s32.totalorder %s21, 0
    %p147 = por %p145, %p146
    %p148 = scmp.ne.s32.totalorder %s136, %s137
    %p149 = scmp.eq.s32.totalorder %s22, 1
    %p150 = por %p148, %p149
    %p152 = scmp.ne.s32.totalorder %s137, %s151
    %p153 = scmp.eq.s32.totalorder %s22, 0
    %p154 = por %p152, %p153
    %s156 = sadd.s32 %s155, 1
    %p159 = scmp.eq.s32.totalorder %s16, 1
    %p160 = scmp.ne.s32.totalorder %s155, %s157
    %p161 = scmp.eq.s32.totalorder %s16, 0
    %p162 = por %p160, %p161
    %p163 = scmp.ne.s32.totalorder %s155, %s157
    %p164 = scmp.eq.s32.totalorder %s21, 1
    %p165 = por %p163, %p164
    %p166 = scmp.ne.s32.totalorder %s157, %s158
    %p167 = scmp.eq.s32.totalorder %s21, 0
    %p168 = por %p166, %p167
    %p169 = scmp.ne.s32.totalorder %s157, %s158
    %p170 = scmp.eq.s32.totalorder %s22, 1
    %p171 = por %p169, %p170
    %p173 = scmp.ne.s32.totalorder %s158, %s172
    %p174 = scmp.eq.s32.totalorder %s22, 0
    %p175 = por %p173, %p174
    %s177 = sadd.s32 %s176, 1
    %p180 = scmp.eq.s32.totalorder %s16, 1
    %p181 = scmp.ne.s32.totalorder %s176, %s178
    %p182 = scmp.eq.s32.totalorder %s16, 0
    %p183 = por %p181, %p182
    %p184 = scmp.ne.s32.totalorder %s176, %s178
    %p185 = scmp.eq.s32.totalorder %s21, 1
    %p186 = por %p184, %p185
    %p187 = scmp.ne.s32.totalorder %s178, %s179
    %p188 = scmp.eq.s32.totalorder %s21, 0
    %p189 = por %p187, %p188
    %p190 = scmp.ne.s32.totalorder %s178, %s179
    %p191 = scmp.eq.s32.totalorder %s22, 1
    %p192 = por %p190, %p191
    %p194 = scmp.ne.s32.totalorder %s179, %s193
    %p195 = scmp.eq.s32.totalorder %s22, 0
    %p196 = por %p194, %p195
    %s198 = sadd.s32 %s197, 1
    %p201 = scmp.eq.s32.totalorder %s16, 1
    %p202 = scmp.ne.s32.totalorder %s197, %s199
    %p203 = scmp.eq.s32.totalorder %s16, 0
    %p204 = por %p202, %p203
    %p205 = scmp.ne.s32.totalorder %s197, %s199
    %p206 = scmp.eq.s32.totalorder %s21, 1
    %p207 = por %p205, %p206
    %p208 = scmp.ne.s32.totalorder %s199, %s200
    %p209 = scmp.eq.s32.totalorder %s21, 0
    %p210 = por %p208, %p209
    %p211 = scmp.ne.s32.totalorder %s199, %s200
    %p212 = scmp.eq.s32.totalorder %s22, 1
    %p213 = por %p211, %p212
    %p215 = scmp.ne.s32.totalorder %s200, %s214
    %p216 = scmp.eq.s32.totalorder %s22, 0
    %p217 = por %p215, %p216
    %s219 = sadd.s32 %s218, 1
    %p222 = scmp.eq.s32.totalorder %s16, 1
    %p223 = scmp.ne.s32.totalorder %s218, %s220
    %p224 = scmp.eq.s32.totalorder %s16, 0
    %p225 = por %p223, %p224
    %p226 = scmp.ne.s32.totalorder %s218, %s220
    %p227 = scmp.eq.s32.totalorder %s21, 1
    %p228 = por %p226, %p227
    %p229 = scmp.ne.s32.totalorder %s220, %s221
    %p230 = scmp.eq.s32.totalorder %s21, 0
    %p231 = por %p229, %p230
    %p232 = scmp.ne.s32.totalorder %s220, %s221
    %p233 = scmp.eq.s32.totalorder %s22, 1
    %p234 = por %p232, %p233
    %p236 = scmp.ne.s32.totalorder %s221, %s235
    %p237 = scmp.eq.s32.totalorder %s22, 0
    %p238 = por %p236, %p237
    %s239 = ssub.s32 %s16, %s23
    %p240 = scmp.eq.s32.totalorder %s239, 0
    %s242 = sadd.s32 %s241, 1
    %s243 = scalar_select %p240, %s241, %s242
    %p246 = pneg %p240
    %p247 = scmp.eq.s32.totalorder %s16, 1
    %p248 = por %p246, %p247
    %p249 = scmp.ne.s32.totalorder %s241, %s244
    %p250 = scmp.eq.s32.totalorder %s16, 0
    %p251 = por %p249, %p250
    %p252 = scmp.ne.s32.totalorder %s241, %s244
    %p253 = scmp.eq.s32.totalorder %s21, 1
    %p254 = por %p252, %p253
    %p255 = scmp.ne.s32.totalorder %s244, %s245
    %p256 = scmp.eq.s32.totalorder %s21, 0
    %p257 = por %p255, %p256
    %p258 = scmp.ne.s32.totalorder %s244, %s245
    %p259 = scmp.eq.s32.totalorder %s22, 1
    %p260 = por %p258, %p259
    %p262 = scmp.ne.s32.totalorder %s245, %s261
    %p263 = scmp.eq.s32.totalorder %s22, 0
    %p264 = por %p262, %p263
    %p265 = scmp.le.s32.totalorder 1, %s16
    %p266 = scmp.lt.s32.totalorder %s16, 3
    %p267 = pnand %p265, %p266
    %p268 = pneg %p267
    // Predicated region
    $region9: #{dsk_forward.1} parent=5 // pred_check
      _
    $region10: #{dsk_forward.1} parent=5 // pred_check_branch
      %270 = sbr.rel (%p267) target = $region12
    $region11: #{dsk_forward.1} parent=5 // pred_region
      %s271 = ssub.s32 %s16, 1
      // Predicated region
      $region13: #{dsk_forward.1} parent=11 // pred_check
        %p272 = pneg %p63
      $region14: #{dsk_forward.1} parent=11 // pred_check_branch
        %274 = sbr.rel (%p272) target = $region16
      $region15: #{dsk_forward.1} parent=11 // pred_region
        _
      $region16: #{dsk_forward.1} parent=11 // pred_fallthru
        _
      // Predicated region
      $region17: #{dsk_forward.1} parent=11 // pred_check
        %p275 = pneg %p84
      $region18: #{dsk_forward.1} parent=11 // pred_check_branch
        %277 = sbr.rel (%p275) target = $region20
      $region19: #{dsk_forward.1} parent=11 // pred_region
        _
      $region20: #{dsk_forward.1} parent=11 // pred_fallthru
        _
      // Predicated region
      $region21: #{dsk_forward.1} parent=11 // pred_check
        %p278 = pneg %p105
      $region22: #{dsk_forward.1} parent=11 // pred_check_branch
        %280 = sbr.rel (%p278) target = $region24
      $region23: #{dsk_forward.1} parent=11 // pred_region
        _
      $region24: #{dsk_forward.1} parent=11 // pred_fallthru
        _
      // Predicated region
      $region25: #{dsk_forward.1} parent=11 // pred_check
        %p281 = pneg %p126
      $region26: #{dsk_forward.1} parent=11 // pred_check_branch
        %283 = sbr.rel (%p281) target = $region28
      $region27: #{dsk_forward.1} parent=11 // pred_region
        _
      $region28: #{dsk_forward.1} parent=11 // pred_fallthru
        _
      // Predicated region
      $region29: #{dsk_forward.1} parent=11 // pred_check
        %p284 = pneg %p147
      $region30: #{dsk_forward.1} parent=11 // pred_check_branch
        %286 = sbr.rel (%p284) target = $region32
      $region31: #{dsk_forward.1} parent=11 // pred_region
        _
      $region32: #{dsk_forward.1} parent=11 // pred_fallthru
        _
      // Predicated region
      $region33: #{dsk_forward.1} parent=11 // pred_check
        %p287 = pneg %p168
      $region34: #{dsk_forward.1} parent=11 // pred_check_branch
        %289 = sbr.rel (%p287) target = $region36
      $region35: #{dsk_forward.1} parent=11 // pred_region
        _
      $region36: #{dsk_forward.1} parent=11 // pred_fallthru
        _
      // Predicated region
      $region37: #{dsk_forward.1} parent=11 // pred_check
        %p290 = pneg %p189
      $region38: #{dsk_forward.1} parent=11 // pred_check_branch
        %292 = sbr.rel (%p290) target = $region40
      $region39: #{dsk_forward.1} parent=11 // pred_region
        _
      $region40: #{dsk_forward.1} parent=11 // pred_fallthru
        _
      // Predicated region
      $region41: #{dsk_forward.1} parent=11 // pred_check
        %p293 = pneg %p210
      $region42: #{dsk_forward.1} parent=11 // pred_check_branch
        %295 = sbr.rel (%p293) target = $region44
      $region43: #{dsk_forward.1} parent=11 // pred_region
        _
      $region44: #{dsk_forward.1} parent=11 // pred_fallthru
        _
      // Predicated region
      $region45: #{dsk_forward.1} parent=11 // pred_check
        %p296 = pneg %p231
      $region46: #{dsk_forward.1} parent=11 // pred_check_branch
        %298 = sbr.rel (%p296) target = $region48
      $region47: #{dsk_forward.1} parent=11 // pred_region
        _
      $region48: #{dsk_forward.1} parent=11 // pred_fallthru
        _
    $region12: #{dsk_forward.1} parent=5 // pred_fallthru
      _
    %p299 = scmp.lt.s32.totalorder %s16, 2
    // Predicated region
    $region49: #{dsk_forward.1} parent=5 // pred_check
      %p300 = pneg %p299
    $region50: #{dsk_forward.1} parent=5 // pred_check_branch
      %302 = sbr.rel (%p300) target = $region52
    $region51: #{dsk_forward.1} parent=5 // pred_region
      // Predicated region
      $region53: #{dsk_forward.1} parent=51 // pred_check
        %p303 = pneg %p36
      $region54: #{dsk_forward.1} parent=51 // pred_check_branch
        %305 = sbr.rel (%p303) target = $region56
      $region55: #{dsk_forward.1} parent=51 // pred_region
        %p306 = scmp.lt.s32.totalorder %s16, 1
        %s307 = scalar_select %p306, %s16, 1
        %s308 = smul.addr %s307, 4
        %s309 = smul.addr %s308, 2
        %s310 = scalar_lea.vmem %s0, %s309
      $region56: #{dsk_forward.1} parent=51 // pred_fallthru
        _
    $region52: #{dsk_forward.1} parent=5 // pred_fallthru
      _
    %p311 = scmp.le.s32.totalorder 1, %s16
    %p312 = scmp.lt.s32.totalorder %s16, 3
    %p313 = pnand %p311, %p312
    %p314 = pneg %p313
    // Predicated region
    $region57: #{dsk_forward.1} parent=5 // pred_check
      _
    $region58: #{dsk_forward.1} parent=5 // pred_check_branch
      %316 = sbr.rel (%p313) target = $region60
    $region59: #{dsk_forward.1} parent=5 // pred_region
      %s317 = ssub.s32 %s16, 1
      %p318 = scmp.lt.s32.totalorder %s21, 1
      %s319 = scalar_select %p318, %s21, 1
      %s320 = smul.addr %s319, 4
      %s321 = smul.addr %s320, 2
      %s322 = scalar_lea.vmem %s0, %s321
      %p323 = pneg %p42
      %p324 = pneg %p39
      %p325 = pneg %p63
      %p326 = pneg %p60
      %p327 = pneg %p84
      %p328 = pneg %p81
      %p329 = pneg %p105
      %p330 = pneg %p102
      %p331 = pneg %p126
      %p332 = pneg %p123
      %p333 = pneg %p147
      %p334 = pneg %p144
      %p335 = pneg %p168
      %p336 = pneg %p165
      %p337 = pneg %p189
      %p338 = pneg %p186
      %p339 = pneg %p210
      %p340 = pneg %p207
      %p341 = pneg %p231
      %p342 = pneg %p228
      %p343 = pneg %p257
      %p344 = pneg %p254
      %p345 = scmp.lt.s32.totalorder %s21, 1
      %s346 = scalar_select %p345, %s21, 1
      %s347 = smul.addr %s346, 2
      %s348 = smul.addr %s347, 4
      %s349 = scalar_lea.vmem %s10, %s348
      %p350 = scmp.lt.s32.totalorder %s21, 1
      %s351 = scalar_select %p350, %s21, 1
      %s352 = smul.addr %s351, 4
      %s353 = smul.addr %s352, 2
      %s354 = scalar_lea.vmem %s0, %s353
      %p355 = scmp.lt.s32.totalorder %s21, 1
      %s356 = scalar_select %p355, %s21, 1
      %s357 = smul.addr %s356, 2
      %s358 = smul.addr %s357, 4
      %s359 = scalar_lea.vmem %s10, %s358
      %v361 = vld [vmem:[%s354] sm:$0x3f]
      %363 = vst [vmem:[#allocation1] ss:$4 sm:$0xff] %v361
      %v364 = vld.sshfl [vmem:[#allocation1] sm:$0xff pattern:$0x73625140]
      %v365 = vld.sshfl [vmem:[#allocation1 + $0x8] sm:$0xff pattern:$0x73625140]
      %v366 = vld.sshfl [vmem:[#allocation1 + $0x10] sm:$0xff pattern:$0x73625140]
      %s367 = scalar_lea.vmem [#allocation1], 1
      %368 = vst [vmem:[%s367] ss:$4 sm:$0xff] %v361
      %v369 = vld.sshfl [vmem:[#allocation1] sm:$0xff pattern:$0x73625140]
      %v371 = vld.sshfl [vmem:[#allocation1 + $0x8] sm:$0xff pattern:$0x73625140]
      %v373 = vld.sshfl [vmem:[#allocation1 + $0x10] sm:$0xff pattern:$0x73625140]
      %375 = vrot.lane.b32.xlu0 %v369, 127
      %v376 = vpop.permute.xlu0 %375
      %377 = vrot.lane.b32.xlu0 %v371, 127
      %v378 = vpop.permute.xlu0 %377
      %379 = vrot.lane.b32.xlu0 %v373, 127
      %v380 = vpop.permute.xlu0 %379
      %vm381 = vcmask 1039360
      %v382 = vsel %vm381, %v376, %v378
      %v383 = vsel %vm381, %v378, %v380
      %s384 = scalar_lea.vmem [#allocation1], 2
      %385 = vst [vmem:[%s384] ss:$4 sm:$0xff] %v361
      %v386 = vld.sshfl [vmem:[#allocation1] sm:$0xff pattern:$0x73625140]
      %v388 = vld.sshfl [vmem:[#allocation1 + $0x8] sm:$0xff pattern:$0x73625140]
      %v390 = vld.sshfl [vmem:[#allocation1 + $0x10] sm:$0xff pattern:$0x73625140]
      %392 = vrot.lane.b32.xlu0 %v386, 126
      %v393 = vpop.permute.xlu0 %392
      %394 = vrot.lane.b32.xlu0 %v388, 126
      %v395 = vpop.permute.xlu0 %394
      %396 = vrot.lane.b32.xlu0 %v390, 126
      %v397 = vpop.permute.xlu0 %396
      %vm398 = vcmask 1031168
      %v399 = vsel %vm398, %v393, %v395
      %v400 = vsel %vm398, %v395, %v397
      %s401 = scalar_lea.vmem [#allocation1], 3
      %402 = vst [vmem:[%s401] ss:$4 sm:$0xff] %v361
      %v403 = vld.sshfl [vmem:[#allocation1] sm:$0xff pattern:$0x73625140]
      %v405 = vld.sshfl [vmem:[#allocation1 + $0x8] sm:$0xff pattern:$0x73625140]
      %v407 = vld.sshfl [vmem:[#allocation1 + $0x10] sm:$0xff pattern:$0x73625140]
      %409 = vrot.lane.b32.xlu0 %v403, 108
      %v410 = vpop.permute.xlu0 %409
      %411 = vrot.lane.b32.xlu0 %v405, 108
      %v412 = vpop.permute.xlu0 %411
      %413 = vrot.lane.b32.xlu0 %v407, 108
      %v414 = vpop.permute.xlu0 %413
      %vm415 = vcmask 883712
      %v416 = vsel %vm415, %v410, %v412
      %v417 = vsel %vm415, %v412, %v414
      %418 = vst [vmem:[#allocation1] ss:$4 sm:$0xff] %v361
      %v419 = vld.sshfl [vmem:[#allocation1] sm:$0xff pattern:$0x73625140]
      %v421 = vld.sshfl [vmem:[#allocation1 + $0x8] sm:$0xff pattern:$0x73625140]
      %v423 = vld.sshfl [vmem:[#allocation1 + $0x10] sm:$0xff pattern:$0x73625140]
      %425 = vrot.lane.b32.xlu0 %v419, 107
      %v426 = vpop.permute.xlu0 %425
      %427 = vrot.lane.b32.xlu0 %v421, 107
      %v428 = vpop.permute.xlu0 %427
      %429 = vrot.lane.b32.xlu0 %v423, 107
      %v430 = vpop.permute.xlu0 %429
      %vm431 = vcmask 875520
      %v432 = vsel %vm431, %v426, %v428
      %v433 = vsel %vm431, %v428, %v430
      %s434 = scalar_lea.vmem [#allocation1], 1
      %435 = vst [vmem:[%s434] ss:$4 sm:$0xff] %v361
      %v436 = vld.sshfl [vmem:[#allocation1] sm:$0xff pattern:$0x73625140]
      %v438 = vld.sshfl [vmem:[#allocation1 + $0x8] sm:$0xff pattern:$0x73625140]
      %v440 = vld.sshfl [vmem:[#allocation1 + $0x10] sm:$0xff pattern:$0x73625140]
      %442 = vrot.lane.b32.xlu0 %v436, 106
      %v443 = vpop.permute.xlu0 %442
      %444 = vrot.lane.b32.xlu0 %v438, 106
      %v445 = vpop.permute.xlu0 %444
      %446 = vrot.lane.b32.xlu0 %v440, 106
      %v447 = vpop.permute.xlu0 %446
      %vm448 = vcmask 867328
      %v449 = vsel %vm448, %v443, %v445
      %v450 = vsel %vm448, %v445, %v447
      %s451 = scalar_lea.vmem [#allocation1], 2
      %452 = vst [vmem:[%s451] ss:$4 sm:$0xff] %v361
      %v453 = vld.sshfl [vmem:[#allocation1] sm:$0xff pattern:$0x73625140]
      %v455 = vld.sshfl [vmem:[#allocation1 + $0x8] sm:$0xff pattern:$0x73625140]
      %v457 = vld.sshfl [vmem:[#allocation1 + $0x10] sm:$0xff pattern:$0x73625140]
      %459 = vrot.lane.b32.xlu0 %v453, 88
      %v460 = vpop.permute.xlu0 %459
      %461 = vrot.lane.b32.xlu0 %v455, 88
      %v462 = vpop.permute.xlu0 %461
      %463 = vrot.lane.b32.xlu0 %v457, 88
      %v464 = vpop.permute.xlu0 %463
      %vm465 = vcmask 719872
      %v466 = vsel %vm465, %v460, %v462
      %v467 = vsel %vm465, %v462, %v464
      %s468 = scalar_lea.vmem [#allocation1], 3
      %469 = vst [vmem:[%s468] ss:$4 sm:$0xff] %v361
      %v470 = vld.sshfl [vmem:[#allocation1] sm:$0xff pattern:$0x73625140]
      %v472 = vld.sshfl [vmem:[#allocation1 + $0x8] sm:$0xff pattern:$0x73625140]
      %v474 = vld.sshfl [vmem:[#allocation1 + $0x10] sm:$0xff pattern:$0x73625140]
      %476 = vrot.lane.b32.xlu0 %v470, 87
      %v477 = vpop.permute.xlu0 %476
      %478 = vrot.lane.b32.xlu0 %v472, 87
      %v479 = vpop.permute.xlu0 %478
      %480 = vrot.lane.b32.xlu0 %v474, 87
      %v481 = vpop.permute.xlu0 %480
      %vm482 = vcmask 711680
      %v483 = vsel %vm482, %v477, %v479
      %v484 = vsel %vm482, %v479, %v481
      %485 = vst [vmem:[#allocation1] ss:$4 sm:$0xff] %v361
      %v486 = vld.sshfl [vmem:[#allocation1] sm:$0xff pattern:$0x73625140]
      %v488 = vld.sshfl [vmem:[#allocation1 + $0x8] sm:$0xff pattern:$0x73625140]
      %v490 = vld.sshfl [vmem:[#allocation1 + $0x10] sm:$0xff pattern:$0x73625140]
      %492 = vrot.lane.b32.xlu0 %v486, 86
      %v493 = vpop.permute.xlu0 %492
      %494 = vrot.lane.b32.xlu0 %v488, 86
      %v495 = vpop.permute.xlu0 %494
      %496 = vrot.lane.b32.xlu0 %v490, 86
      %v497 = vpop.permute.xlu0 %496
      %vm498 = vcmask 703488
      %v499 = vsel %vm498, %v493, %v495
      %v500 = vsel %vm498, %v495, %v497
      %vm501 = vcmask 1041408
      %v503 = vsel %vm501, %v364, %v382
      %v505 = vsel %vm501, %v365, %v383
      %v507 = vsel %vm501, %v366, %v380
      %vm508 = vcmask 1043456
      %v510 = vsel %vm508, %v503, %v399
      %v512 = vsel %vm508, %v505, %v400
      %v514 = vsel %vm508, %v507, %v397
      %vm515 = vcmask 1045504
      %v517 = vsel %vm515, %v510, %v416
      %v519 = vsel %vm515, %v512, %v417
      %v521 = vsel %vm515, %v514, %v414
      %v524 = vsel %vm501, %v432, %v449
      %v527 = vsel %vm501, %v433, %v450
      %v530 = vsel %vm501, %v430, %v447
      %v532 = vsel %vm508, %v524, %v466
      %v534 = vsel %vm508, %v527, %v467
      %v536 = vsel %vm508, %v530, %v464
      %v538 = vsel %vm515, %v532, %v483
      %v540 = vsel %vm515, %v534, %v484
      %v542 = vsel %vm515, %v536, %v481
      %v543 = vld [vmem:[%s2] sm:$0x3]
      %v544 = vld [vmem:[%s3] sm:$0xf]
      %546 = vset.pattern.permute.xlu0 0
      %547 = vperm.xlu0 %546, %v544
      %v548 = vpop.permute.xlu0 %547
      %556 = vrot.lane.b32.xlu0 %v517, 107
      %v557 = vpop.permute.xlu0 %556
      %558 = vrot.lane.b32.xlu0 %v519, 107
      %v559 = vpop.permute.xlu0 %558
      %560 = vrot.lane.b32.xlu0 %v521, 107
      %v561 = vpop.permute.xlu0 %560
      %562 = vrot.lane.b32.xlu0 %v538, 107
      %v563 = vpop.permute.xlu0 %562
      %564 = vrot.lane.b32.xlu0 %v540, 107
      %v565 = vpop.permute.xlu0 %564
      %566 = vrot.lane.b32.xlu0 %v542, 107
      %v567 = vpop.permute.xlu0 %566
      %568 = vrot.lane.b32.xlu0 %v499, 107
      %v569 = vpop.permute.xlu0 %568
      %570 = vrot.lane.b32.xlu0 %v500, 107
      %v571 = vpop.permute.xlu0 %570
      %572 = vrot.lane.b32.xlu0 %v497, 107
      %v573 = vpop.permute.xlu0 %572
      %v574 = vsel %vm431, %v557, %v559
      %v575 = vsel %vm431, %v559, %v561
      %v576 = vsel %vm431, %v563, %v565
      %v577 = vsel %vm431, %v565, %v567
      %v578 = vsel %vm431, %v569, %v571
      %v579 = vsel %vm431, %v571, %v573
      %vm586 = vcmask 293888
      %v588 = vsel %vm586, %v543, 0
      %v591 = vsel %vm501, %v578, 0
      %v594 = vsel %vm501, %v579, 0
      %v597 = vsel %vm501, %v573, 0
      %599 = vmatpush.bf16.msra.mxu0 0
      %600 = vmatpush.bf16.msra.mxu0 0
      %601 = vmatpush.bf16.msra.mxu0 0
      %602 = vmatpush.bf16.msra.mxu0 0
      %603 = vmatpush.bf16.msra.mxu0 0
      %604 = vmatpush.bf16.msra.mxu0 %v591
      %605 = vmatpush.bf16.msra.mxu0 %v576
      %606 = vmatpush.bf16.msra.mxu0 %v574
      %607 = vmatmul.bf16.gmra.mxu0 %v588
      %v608 = vpop.f32.mrf.mxu0
      %v609 = vadd.f32 %v548, %v608
      %v610 = vpop.f32.mrf.mxu0
      %611 = vdwg.mxu0
      %612 = vmatpush.bf16.msra.mxu0 0
      %613 = vmatpush.bf16.msra.mxu0 0
      %614 = vmatpush.bf16.msra.mxu0 0
      %615 = vmatpush.bf16.msra.mxu0 0
      %616 = vmatpush.bf16.msra.mxu0 0
      %617 = vmatpush.bf16.msra.mxu0 %v594
      %618 = vmatpush.bf16.msra.mxu0 %v577
      %619 = vmatpush.bf16.msra.mxu0 %v575
      %620 = vmatmul.bf16.gmra.mxu0 %v588
      %v621 = vpop.f32.mrf.mxu0
      %v622 = vadd.f32 %v548, %v621
      %v623 = vpop.f32.mrf.mxu0
      %624 = vdwg.mxu0
      %625 = vmatpush.bf16.msra.mxu0 0
      %626 = vmatpush.bf16.msra.mxu0 0
      %627 = vmatpush.bf16.msra.mxu0 0
      %628 = vmatpush.bf16.msra.mxu0 0
      %629 = vmatpush.bf16.msra.mxu0 0
      %630 = vmatpush.bf16.msra.mxu0 %v597
      %631 = vmatpush.bf16.msra.mxu0 %v567
      %632 = vmatpush.bf16.msra.mxu0 %v561
      %633 = vmatmul.bf16.gmra.mxu0 %v588
      %v634 = vpop.f32.mrf.mxu0
      %v635 = vadd.f32 %v548, %v634
      %v636 = vpop.f32.mrf.mxu0
      %637 = vdwg.mxu0
      %v640 = vrot.slane %v622, 4
      %v641 = vsel %vm508, %v609, %v640
      %643 = vst [vmem:[#allocation2] sm:$0xff] %v641
      %vm644 = vcmask 519168
      %645 = vst.msk [vmem:[#allocation2 + $0x8] sm:$0xf] %vm644, %v635
      %v646 = vld [vmem:[%s354] sm:$0x3f]
      %v647 = vld [vmem:[%s354] sm:$0xff]
      %649 = vst [vmem:[#allocation1] ss:$4 sm:$0xff] %v646
      %v650 = vld.sshfl [vmem:[#allocation1] sm:$0xff pattern:$0x73625140]
      %v651 = vld.sshfl [vmem:[#allocation1 + $0x8] sm:$0xff pattern:$0x73625140]
      %v652 = vld.sshfl [vmem:[#allocation1 + $0x10] sm:$0xff pattern:$0x73625140]
      %s653 = scalar_lea.vmem [#allocation1], 1
      %654 = vst [vmem:[%s653] ss:$4 sm:$0xff] %v646
      %v655 = vld.sshfl [vmem:[#allocation1] sm:$0xff pattern:$0x73625140]
      %v657 = vld.sshfl [vmem:[#allocation1 + $0x8] sm:$0xff pattern:$0x73625140]
      %v659 = vld.sshfl [vmem:[#allocation1 + $0x10] sm:$0xff pattern:$0x73625140]
      %661 = vrot.lane.b32.xlu0 %v655, 126
      %v662 = vpop.permute.xlu0 %661
      %663 = vrot.lane.b32.xlu0 %v657, 126
      %v664 = vpop.permute.xlu0 %663
      %665 = vrot.lane.b32.xlu0 %v659, 126
      %v666 = vpop.permute.xlu0 %665
      %v667 = vsel %vm398, %v662, %v664
      %v668 = vsel %vm398, %v664, %v666
      %s669 = scalar_lea.vmem [#allocation1], 2
      %670 = vst [vmem:[%s669] ss:$4 sm:$0xff] %v646
      %v671 = vld.sshfl [vmem:[#allocation1] sm:$0xff pattern:$0x73625140]
      %v673 = vld.sshfl [vmem:[#allocation1 + $0x8] sm:$0xff pattern:$0x73625140]
      %v675 = vld.sshfl [vmem:[#allocation1 + $0x10] sm:$0xff pattern:$0x73625140]
      %677 = vrot.lane.b32.xlu0 %v671, 124
      %v678 = vpop.permute.xlu0 %677
      %679 = vrot.lane.b32.xlu0 %v673, 124
      %v680 = vpop.permute.xlu0 %679
      %681 = vrot.lane.b32.xlu0 %v675, 124
      %v682 = vpop.permute.xlu0 %681
      %vm683 = vcmask 1014784
      %v684 = vsel %vm683, %v678, %v680
      %v685 = vsel %vm683, %v680, %v682
      %s686 = scalar_lea.vmem [#allocation1], 3
      %687 = vst [vmem:[%s686] ss:$4 sm:$0xff] %v646
      %v688 = vld.sshfl [vmem:[#allocation1] sm:$0xff pattern:$0x73625140]
      %v690 = vld.sshfl [vmem:[#allocation1 + $0x8] sm:$0xff pattern:$0x73625140]
      %v692 = vld.sshfl [vmem:[#allocation1 + $0x10] sm:$0xff pattern:$0x73625140]
      %694 = vrot.lane.b32.xlu0 %v688, 88
      %v695 = vpop.permute.xlu0 %694
      %696 = vrot.lane.b32.xlu0 %v690, 88
      %v697 = vpop.permute.xlu0 %696
      %698 = vrot.lane.b32.xlu0 %v692, 88
      %v699 = vpop.permute.xlu0 %698
      %v700 = vsel %vm465, %v695, %v697
      %v701 = vsel %vm465, %v697, %v699
      %702 = vst [vmem:[#allocation1] ss:$4 sm:$0xff] %v646
      %v703 = vld.sshfl [vmem:[#allocation1] sm:$0xff pattern:$0x73625140]
      %v705 = vld.sshfl [vmem:[#allocation1 + $0x8] sm:$0xff pattern:$0x73625140]
      %v707 = vld.sshfl [vmem:[#allocation1 + $0x10] sm:$0xff pattern:$0x73625140]
      %709 = vrot.lane.b32.xlu0 %v703, 86
      %v710 = vpop.permute.xlu0 %709
      %711 = vrot.lane.b32.xlu0 %v705, 86
      %v712 = vpop.permute.xlu0 %711
      %713 = vrot.lane.b32.xlu0 %v707, 86
      %v714 = vpop.permute.xlu0 %713
      %v715 = vsel %vm498, %v710, %v712
      %v716 = vsel %vm498, %v712, %v714
      %s717 = scalar_lea.vmem [#allocation1], 1
      %718 = vst [vmem:[%s717] ss:$4 sm:$0xff] %v646
      %v719 = vld.sshfl [vmem:[#allocation1] sm:$0xff pattern:$0x73625140]
      %v721 = vld.sshfl [vmem:[#allocation1 + $0x8] sm:$0xff pattern:$0x73625140]
      %v723 = vld.sshfl [vmem:[#allocation1 + $0x10] sm:$0xff pattern:$0x73625140]
      %725 = vrot.lane.b32.xlu0 %v719, 84
      %v726 = vpop.permute.xlu0 %725
      %727 = vrot.lane.b32.xlu0 %v721, 84
      %v728 = vpop.permute.xlu0 %727
      %729 = vrot.lane.b32.xlu0 %v723, 84
      %v730 = vpop.permute.xlu0 %729
      %vm731 = vcmask 687104
      %v732 = vsel %vm731, %v726, %v728
      %v733 = vsel %vm731, %v728, %v730
      %s735 = scalar_lea.vmem [#allocation1], 2
      %736 = vst [vmem:[%s735] ss:$4 sm:$0xff] %v647
      %v737 = vld.sshfl [vmem:[#allocation1] sm:$0xff pattern:$0x73625140]
      %v739 = vld.sshfl [vmem:[#allocation1 + $0x8] sm:$0xff pattern:$0x73625140]
      %v741 = vld.sshfl [vmem:[#allocation1 + $0x10] sm:$0xff pattern:$0x73625140]
      %v743 = vld.sshfl [vmem:[#allocation1 + $0x18] sm:$0xff pattern:$0x73625140]
      %745 = vrot.lane.b32.xlu0 %v737, 48
      %v746 = vpop.permute.xlu0 %745
      %747 = vrot.lane.b32.xlu0 %v739, 48
      %v748 = vpop.permute.xlu0 %747
      %749 = vrot.lane.b32.xlu0 %v741, 48
      %v750 = vpop.permute.xlu0 %749
      %751 = vrot.lane.b32.xlu0 %v743, 48
      %v752 = vpop.permute.xlu0 %751
      %vm753 = vcmask 392192
      %v754 = vsel %vm753, %v746, %v748
      %v755 = vsel %vm753, %v748, %v750
      %v756 = vsel %vm753, %v750, %v752
      %s757 = scalar_lea.vmem [#allocation1], 3
      %758 = vst [vmem:[%s757] ss:$4 sm:$0xff] %v647
      %v759 = vld.sshfl [vmem:[#allocation1] sm:$0xff pattern:$0x73625140]
      %v761 = vld.sshfl [vmem:[#allocation1 + $0x8] sm:$0xff pattern:$0x73625140]
      %v763 = vld.sshfl [vmem:[#allocation1 + $0x10] sm:$0xff pattern:$0x73625140]
      %v765 = vld.sshfl [vmem:[#allocation1 + $0x18] sm:$0xff pattern:$0x73625140]
      %767 = vrot.lane.b32.xlu0 %v759, 46
      %v768 = vpop.permute.xlu0 %767
      %769 = vrot.lane.b32.xlu0 %v761, 46
      %v770 = vpop.permute.xlu0 %769
      %771 = vrot.lane.b32.xlu0 %v763, 46
      %v772 = vpop.permute.xlu0 %771
      %773 = vrot.lane.b32.xlu0 %v765, 46
      %v774 = vpop.permute.xlu0 %773
      %vm775 = vcmask 375808
      %v776 = vsel %vm775, %v768, %v770
      %v777 = vsel %vm775, %v770, %v772
      %v778 = vsel %vm775, %v772, %v774
      %779 = vst [vmem:[#allocation1] ss:$4 sm:$0xff] %v647
      %v780 = vld.sshfl [vmem:[#allocation1] sm:$0xff pattern:$0x73625140]
      %v782 = vld.sshfl [vmem:[#allocation1 + $0x8] sm:$0xff pattern:$0x73625140]
      %v784 = vld.sshfl [vmem:[#allocation1 + $0x10] sm:$0xff pattern:$0x73625140]
      %v786 = vld.sshfl [vmem:[#allocation1 + $0x18] sm:$0xff pattern:$0x73625140]
      %788 = vrot.lane.b32.xlu0 %v780, 44
      %v789 = vpop.permute.xlu0 %788
      %790 = vrot.lane.b32.xlu0 %v782, 44
      %v791 = vpop.permute.xlu0 %790
      %792 = vrot.lane.b32.xlu0 %v784, 44
      %v793 = vpop.permute.xlu0 %792
      %794 = vrot.lane.b32.xlu0 %v786, 44
      %v795 = vpop.permute.xlu0 %794
      %vm796 = vcmask 359424
      %v797 = vsel %vm796, %v789, %v791
      %v798 = vsel %vm796, %v791, %v793
      %v799 = vsel %vm796, %v793, %v795
      %v801 = vsel %vm501, %v650, %v667
      %v803 = vsel %vm501, %v651, %v668
      %v805 = vsel %vm501, %v652, %v666
      %v807 = vsel %vm508, %v801, %v684
      %v809 = vsel %vm508, %v803, %v685
      %v811 = vsel %vm508, %v805, %v682
      %v813 = vsel %vm515, %v807, %v700
      %v816 = vsel %vm515, %v809, %v701
      %v819 = vsel %vm515, %v811, %v699
      %v823 = vsel %vm501, %v715, %v732
      %v826 = vsel %vm501, %v716, %v733
      %v829 = vsel %vm501, %v714, %v730
      %v831 = vsel %vm508, %v823, %v754
      %v833 = vsel %vm508, %v826, %v755
      %v835 = vsel %vm508, %v829, %v756
      %v837 = vsel %vm515, %v831, %v776
      %v840 = vsel %vm515, %v833, %v777
      %v843 = vsel %vm515, %v835, %v778
      %v845 = vld [vmem:[%s4] sm:$0x3]
      %v846 = vld [vmem:[%s5] sm:$0xf]
      %848 = vset.pattern.permute.xlu0 0
      %849 = vperm.xlu0 %848, %v846
      %v850 = vpop.permute.xlu0 %849
      %v853 = vsel %vm586, %v845, 0
      %v856 = vsel %vm501, %v797, 0
      %v859 = vsel %vm501, %v798, 0
      %v862 = vsel %vm501, %v799, 0
      %864 = vmatpush.bf16.msra.mxu0 0
      %865 = vmatpush.bf16.msra.mxu0 0
      %866 = vmatpush.bf16.msra.mxu0 0
      %867 = vmatpush.bf16.msra.mxu0 0
      %868 = vmatpush.bf16.msra.mxu0 0
      %869 = vmatpush.bf16.msra.mxu0 %v856
      %870 = vmatpush.bf16.msra.mxu0 %v837
      %871 = vmatpush.bf16.msra.mxu0 %v813
      %872 = vmatmul.bf16.gmra.mxu0 %v853
      %v873 = vpop.f32.mrf.mxu0
      %v874 = vadd.f32 %v850, %v873
      %v875 = vpop.f32.mrf.mxu0
      %876 = vdwg.mxu0
      %877 = vmatpush.bf16.msra.mxu0 0
      %878 = vmatpush.bf16.msra.mxu0 0
      %879 = vmatpush.bf16.msra.mxu0 0
      %880 = vmatpush.bf16.msra.mxu0 0
      %881 = vmatpush.bf16.msra.mxu0 0
      %882 = vmatpush.bf16.msra.mxu0 %v859
      %883 = vmatpush.bf16.msra.mxu0 %v840
      %884 = vmatpush.bf16.msra.mxu0 %v816
      %885 = vmatmul.bf16.gmra.mxu0 %v853
      %v886 = vpop.f32.mrf.mxu0
      %v887 = vadd.f32 %v850, %v886
      %v888 = vpop.f32.mrf.mxu0
      %889 = vdwg.mxu0
      %890 = vmatpush.bf16.msra.mxu0 0
      %891 = vmatpush.bf16.msra.mxu0 0
      %892 = vmatpush.bf16.msra.mxu0 0
      %893 = vmatpush.bf16.msra.mxu0 0
      %894 = vmatpush.bf16.msra.mxu0 0
      %895 = vmatpush.bf16.msra.mxu0 %v862
      %896 = vmatpush.bf16.msra.mxu0 %v843
      %897 = vmatpush.bf16.msra.mxu0 %v819
      %898 = vmatmul.bf16.gmra.mxu0 %v853
      %v899 = vpop.f32.mrf.mxu0
      %v900 = vadd.f32 %v850, %v899
      %v901 = vpop.f32.mrf.mxu0
      %902 = vdwg.mxu0
      %v905 = vrot.slane %v887, 4
      %v906 = vsel %vm508, %v874, %v905
      %908 = vst [vmem:[#allocation3] sm:$0xff] %v906
      %909 = vst.msk [vmem:[#allocation3 + $0x8] sm:$0xf] %vm644, %v900
      %v910 = vld [vmem:[#allocation2] sm:$0xff]
      %v911 = vld [vmem:[#allocation2 + $0x8] sm:$0xf]
      %v912 = vld [vmem:[#allocation3] sm:$0xff]
      %v913 = vld [vmem:[#allocation3 + $0x8] sm:$0xf]
      %v914 = vadd.f32 %v910, %v912
      %v915 = vadd.f32 %v911, %v913
      %v916 = vld [vmem:[%s1] sm:$0x7]
      %v918 = vperm.slane %v916, 0
      %v919 = vperm.slane %v916, 1
      %v920 = vperm.slane %v916, 2
      %v922 = vrot.slane %v919, 4
      %v923 = vsel %vm508, %v918, %v922
      %v925 = vmul.f32 %v914, %v923
      %v926 = vmul.f32 %v915, %v920
      %929 = vst [vmem:[#allocation1] ss:$2 sm:$0xff] %v925
      %s930 = scalar_lea.vmem [#allocation1], 16
      %931 = vst [vmem:[%s930] ss:$2 sm:$0xff] %v926
      %v932 = vld.sshfl [vmem:[#allocation1] sm:$0xff pattern:$0x75316420]
      %v933 = vld.sshfl [vmem:[#allocation1 + $0x8] sm:$0xff pattern:$0x75316420]
      %v934 = vld.sshfl [vmem:[#allocation1 + $0x10] sm:$0xff pattern:$0x75316420]
      %v938 = vsel %vm508, %v932, 0.0
      %v939 = vsel %vm508, %v933, 0.0
      %v940 = vadd.f32 %v938, %v939
      %v941 = vsel %vm644, %v934, 0.0
      %v942 = vadd.f32 %v940, %v941
      %943 = vadd.xlane.f32.xlu0 %v942
      %v944 = vpop.xlane.xlu0 %943
      %v945 = vmul.f32 %v944, 0.00390625
      %v946 = vld [vmem:[%s6] sm:$0xff]
      %v947 = vld [vmem:[%s6 + $0x8] sm:$0xff]
      %v948 = vld [vmem:[%s6 + $0x10] sm:$0xff]
      %v949 = vld [vmem:[%s6 + $0x18] sm:$0xff]
      %v950 = vld [vmem:[%s7] sm:$0xff]
      %v951 = vld [vmem:[%s7 + $0x8] sm:$0xff]
      %v952 = vld [vmem:[%s7 + $0x10] sm:$0xff]
      %v953 = vld [vmem:[%s7 + $0x18] sm:$0xff]
      %vm954 = vcmask 31744
      %v956 = vsel %vm954, %v946, 0
      %v959 = vsel %vm954, %v947, 0
      %v962 = vsel %vm954, %v948, 0
      %v965 = vsel %vm954, %v949, 0
      %v968 = vsel %vm508, %v945, 0
      %970 = vmatpush.msra.mxu0 0.0
      %971 = vmatpush.msra.mxu0 0.0
      %972 = vmatpush.msra.mxu0 0.0
      %973 = vmatpush.msra.mxu0 0.0
      %974 = vmatpush.msra.mxu0 0.0
      %975 = vmatpush.msra.mxu0 0.0
      %976 = vmatpush.msra.mxu0 0.0
      %977 = vmatpush.msra.mxu0 0.0
      %978 = vmatpush.msra.mxu0 0.0
      %979 = vmatpush.msra.mxu0 0.0
      %980 = vmatpush.msra.mxu0 0.0
      %981 = vmatpush.msra.mxu0 0.0
      %982 = vmatpush.msra.mxu0 0.0
      %983 = vmatpush.msra.mxu0 0.0
      %984 = vmatpush.msra.mxu0 0.0
      %985 = vmatpush.msra.mxu0 %v968
      %986 = vmatmul.f32.gmra.mxu0 %v956
      %v987 = vpop.f32.mrf.mxu0
      %v988 = vadd.f32 %v950, %v987
      %989 = vmatmul.f32.gmra.mxu0 %v959
      %v990 = vpop.f32.mrf.mxu0
      %v991 = vadd.f32 %v951, %v990
      %992 = vmatmul.f32.gmra.mxu0 %v962
      %v993 = vpop.f32.mrf.mxu0
      %v994 = vadd.f32 %v952, %v993
      %995 = vmatmul.f32.gmra.mxu0 %v965
      %v996 = vpop.f32.mrf.mxu0
      %v997 = vadd.f32 %v953, %v996
      %998 = vdwg.mxu0
      %v999 = vld [vmem:[%s8] sm:$0xff]
      %v1000 = vld [vmem:[%s9] sm:$0xff]
      %vm1001 = vcmask 261120
      %v1003 = vsel %vm1001, %v999, 0
      %1005 = vmatpush.msra.mxu0 0.0
      %1006 = vmatpush.msra.mxu0 0.0
      %1007 = vmatpush.msra.mxu0 0.0
      %1008 = vmatpush.msra.mxu0 0.0
      %1009 = vmatpush.msra.mxu0 0.0
      %1010 = vmatpush.msra.mxu0 0.0
      %1011 = vmatpush.msra.mxu0 0.0
      %1012 = vmatpush.msra.mxu0 0.0
      %1013 = vmatpush.msra.mxu0 0.0
      %1014 = vmatpush.msra.mxu0 0.0
      %1015 = vmatpush.msra.mxu0 0.0
      %1016 = vmatpush.msra.mxu0 0.0
      %1017 = vmatpush.msra.mxu0 %v997
      %1018 = vmatpush.msra.mxu0 %v994
      %1019 = vmatpush.msra.mxu0 %v991
      %1020 = vmatpush.msra.mxu0 %v988
      %1021 = vmatmul.f32.gmra.mxu0 %v1003
      %v1022 = vpop.f32.mrf.mxu0
      %v1023 = vadd.f32 %v1000, %v1022
      %1024 = vdwg.mxu0
      %v1026 = vrot.slane %v1023, 4
      %v1028 = vmax.f32 %v1023, %v1026
      %v1029 = vsub.f32 %v1023, %v1028
      %v1030 = vmul.f32 %v1029, 1.442695
      %v1031 = vpow.pop %v1030
      %v1033 = vrot.slane %v1028, 4
      %v1035 = vsub.f32 %v1023, %v1033
      %v1036 = vmul.f32 %v1035, 1.442695
      %v1037 = vpow.pop %v1036
      %v1039 = vrot.slane %v1037, 4
      %v1041 = vadd.f32 %v1031, %v1039
      %v1042 = vrcp.pop %v1041
      %v1043 = vmul.f32 %v1041, %v1042
      %v1044 = vsub.f32 1.0, %v1043
      %v1045 = vmul.f32 %v1042, %v1044
      %v1046 = vadd.f32 %v1042, %v1045
      %vm1047 = vweird.f32 %v1041
      %vm1048 = vweird.f32 %v1042
      %vm1049 = vmor %vm1047, %vm1048
      %v1050 = vsel %vm1049, %v1042, %v1046
      %v1051 = vand.u32 2147483647, %v1041
      %vm1052 = vcmp.eq.f32.partialorder %v1051, 8.507059e+37
      %v1053 = vand.u32 %v1041, 2147483648
      %v1054 = vor.u32 1.1754944e-38, %v1053
      %v1055 = vsel %vm1052, %v1054, %v1050
      %v1056 = vmul.f32 1.0, %v1055
      %v1057 = vmul.f32 %v1031, %v1056
      %v1059 = vrot.slane %v1056, 4
      %v1061 = vmul.f32 %v1037, %v1059
      %1063 = vset.pattern.permute.xlu0 0
      %1064 = vperm.xlu0 %1063, %v1057
      %v1065 = vpop.permute.xlu0 %1064
      %1069 = vst [vmem:[#allocation1] ss:$2 sm:$0xff] %v910
      %s1070 = scalar_lea.vmem [#allocation1], 16
      %1071 = vst [vmem:[%s1070] ss:$2 sm:$0xff] %v911
      %v1072 = vld.sshfl [vmem:[#allocation1] sm:$0xff pattern:$0x75316420]
      %v1073 = vld.sshfl [vmem:[#allocation1 + $0x8] sm:$0xff pattern:$0x75316420]
      %v1074 = vld.sshfl [vmem:[#allocation1 + $0x10] sm:$0xff pattern:$0x75316420]
      %v1078 = vmul.f32 %v1065, %v1072
      %v1079 = vmul.f32 %v1065, %v1073
      %v1080 = vmul.f32 %v1065, %v1074
      %1082 = vset.pattern.permute.xlu0 0
      %1083 = vperm.xlu0 %1082, %v1061
      %v1084 = vpop.permute.xlu0 %1083
      %s1088 = scalar_lea.vmem [#allocation1], 1
      %1089 = vst [vmem:[%s1088] ss:$2 sm:$0xff] %v912
      %s1090 = scalar_lea.vmem [#allocation1], 17
      %1091 = vst [vmem:[%s1090] ss:$2 sm:$0xff] %v913
      %v1092 = vld.sshfl [vmem:[#allocation1] sm:$0xff pattern:$0x75316420]
      %v1093 = vld.sshfl [vmem:[#allocation1 + $0x8] sm:$0xff pattern:$0x75316420]
      %v1094 = vld.sshfl [vmem:[#allocation1 + $0x10] sm:$0xff pattern:$0x75316420]
      %v1098 = vmul.f32 %v1084, %v1092
      %v1099 = vmul.f32 %v1084, %v1093
      %v1100 = vmul.f32 %v1084, %v1094
      %v1104 = vrot.slane %v1098, 4
      %v1105 = vrot.slane %v1099, 4
      %v1106 = vrot.slane %v1100, 4
      %v1110 = vadd.f32 %v1078, %v1104
      %v1111 = vadd.f32 %v1079, %v1105
      %v1112 = vadd.f32 %v1080, %v1106
      %1114 = vrot.lane.b32.xlu0 %v1110, 126
      %v1115 = vpop.permute.xlu0 %1114
      %vm1117 = vcmask 125952
      %1118 = vst.msk [vmem:[%s359] sm:$0xf] %vm1117, %v1115
      %1119 = vrot.lane.b32.xlu0 %v1110, 122
      %v1120 = vpop.permute.xlu0 %1119
      %vm1122 = vcmask 257152
      %1123 = vst.msk [vmem:[%s359] sm:$0xf] %vm1122, %v1120
      %1124 = vrot.lane.b32.xlu0 %v1110, 118
      %v1125 = vpop.permute.xlu0 %1124
      %vm1127 = vcmask 388352
      %1128 = vst.msk [vmem:[%s359] sm:$0xf] %vm1127, %v1125
      %1129 = vrot.lane.b32.xlu0 %v1110, 114
      %v1130 = vpop.permute.xlu0 %1129
      %vm1132 = vcmask 519552
      %1133 = vst.msk [vmem:[%s359] sm:$0xf] %vm1132, %v1130
      %1134 = vrot.lane.b32.xlu0 %v1110, 110
      %v1135 = vpop.permute.xlu0 %1134
      %vm1137 = vcmask 650752
      %1138 = vst.msk [vmem:[%s359] sm:$0xf] %vm1137, %v1135
      %1139 = vrot.lane.b32.xlu0 %v1110, 106
      %v1140 = vpop.permute.xlu0 %1139
      %vm1142 = vcmask 781952
      %1143 = vst.msk [vmem:[%s359] sm:$0xf] %vm1142, %v1140
      %v1145 = vrot.slane %v1111, 4
      %v1146 = vsel %vm508, %v1110, %v1145
      %1147 = vrot.lane.b32.xlu0 %v1146, 102
      %v1148 = vpop.permute.xlu0 %1147
      %v1149 = vrot.slane %v1148, 4
      %vm1150 = vcmask 834560
      %v1151 = vsel %vm1150, %v1148, %v1149
      %vm1153 = vcmask 913152
      %1154 = vst.msk [vmem:[%s359] sm:$0xf] %vm1153, %v1151
      %1155 = vrot.lane.b32.xlu0 %v1111, 98
      %v1156 = vpop.permute.xlu0 %1155
      %vm1158 = vcmask 1044352
      %1159 = vst.msk [vmem:[%s359] sm:$0xf] %vm1158, %v1156
      %1160 = vrot.lane.b32.xlu0 %v1111, 94
      %v1161 = vpop.permute.xlu0 %1160
      %1163 = vst.msk [vmem:[%s359 + $0x4] sm:$0xf] %vm1117, %v1161
      %1164 = vrot.lane.b32.xlu0 %v1111, 90
      %v1165 = vpop.permute.xlu0 %1164
      %1167 = vst.msk [vmem:[%s359 + $0x4] sm:$0xf] %vm1122, %v1165
      %1168 = vrot.lane.b32.xlu0 %v1111, 86
      %v1169 = vpop.permute.xlu0 %1168
      %1171 = vst.msk [vmem:[%s359 + $0x4] sm:$0xf] %vm1127, %v1169
      %1172 = vrot.lane.b32.xlu0 %v1111, 82
      %v1173 = vpop.permute.xlu0 %1172
      %1175 = vst.msk [vmem:[%s359 + $0x4] sm:$0xf] %vm1132, %v1173
      %v1177 = vrot.slane %v1112, 4
      %v1178 = vsel %vm508, %v1111, %v1177
      %1179 = vrot.lane.b32.xlu0 %v1178, 78
      %v1180 = vpop.permute.xlu0 %1179
      %v1181 = vrot.slane %v1180, 4
      %vm1182 = vcmask 637952
      %v1183 = vsel %vm1182, %v1180, %v1181
      %1185 = vst.msk [vmem:[%s359 + $0x4] sm:$0xf] %vm1137, %v1183
      %1186 = vrot.lane.b32.xlu0 %v1112, 74
      %v1187 = vpop.permute.xlu0 %1186
      %1189 = vst.msk [vmem:[%s359 + $0x4] sm:$0xf] %vm1142, %v1187
      %1190 = vrot.lane.b32.xlu0 %v1112, 70
      %v1191 = vpop.permute.xlu0 %1190
      %1193 = vst.msk [vmem:[%s359 + $0x4] sm:$0xf] %vm1153, %v1191
      %1194 = vrot.lane.b32.xlu0 %v1112, 66
      %v1195 = vpop.permute.xlu0 %1194
      %1197 = vst.msk [vmem:[%s359 + $0x4] sm:$0xf] %vm1158, %v1195
      %p1198 = scmp.lt.s32.totalorder %s21, 1
      %s1199 = scalar_select %p1198, %s21, 1
      %s1200 = smul.addr %s1199, 2
      %s1201 = smul.addr %s1200, 4
      %s1202 = scalar_lea.vmem %s10, %s1201
      // Predicated region
      $region61: #{dsk_forward.1} parent=59 // pred_check
        %p1203 = pneg %p254
      $region62: #{dsk_forward.1} parent=59 // pred_check_branch
        %1205 = sbr.rel (%p1203) target = $region64
      $region63: #{dsk_forward.1} parent=59 // pred_region
        _
      $region64: #{dsk_forward.1} parent=59 // pred_fallthru
        _
    $region60: #{dsk_forward.1} parent=5 // pred_fallthru
      _
    %p1206 = scmp.le.s32.totalorder 2, %s16
    // Predicated region
    $region65: #{dsk_forward.1} parent=5 // pred_check
      %p1207 = pneg %p1206
    $region66: #{dsk_forward.1} parent=5 // pred_check_branch
      %1209 = sbr.rel (%p1207) target = $region68
    $region67: #{dsk_forward.1} parent=5 // pred_region
      %s1210 = ssub.s32 %s16, 2
      // Predicated region
      $region69: #{dsk_forward.1} parent=67 // pred_check
        %p1211 = pneg %p260
      $region70: #{dsk_forward.1} parent=67 // pred_check_branch
        %1213 = sbr.rel (%p1211) target = $region72
      $region71: #{dsk_forward.1} parent=67 // pred_region
        %p1214 = scmp.lt.s32.totalorder %s22, 1
        %s1215 = scalar_select %p1214, %s22, 1
        %s1216 = smul.addr %s1215, 2
        %s1217 = smul.addr %s1216, 4
        %s1218 = scalar_lea.vmem %s10, %s1217
      $region72: #{dsk_forward.1} parent=67 // pred_fallthru
        _
    $region68: #{dsk_forward.1} parent=5 // pred_fallthru
      _
  $region6: #{dsk_forward.1} parent=0 // loop_footer
    %s20 = sadd.s32 1, %s16
  $region7: #{dsk_forward.1} parent=0 // loop_footer_branch
    %15 = sbr.rel target = $region3
  $region8: #{dsk_forward.1} parent=0 // loop_exit
    _

</llo_original>
